<compile_context>
chip_gen: v6e
topology: v6e:2x2x1
jax: 0.10.0
libtpu: 0.0.40
codegen_flags: <defaults>
</compile_context>

<pallas_src>
import functools
import math

import jax
import jax.numpy as jnp
import numpy as np
from jax.experimental import pallas as pl
from jax.experimental.pallas import tpu as pltpu

H = 150  # fR hidden width; also the uniform lane-pad width for the packed slabs.


def _round_up(n, m):
    return ((n + m - 1) // m) * m


# ---------------------------------------------------------------------------
# Pallas kernel: one grid step = one full IN_ODEfunc RHS evaluation
# ---------------------------------------------------------------------------
def in_odefunc_kernel(
    ts_ref,       # SMEM (S,)                times, resident for the whole grid
    o_ref,        # VMEM (N_obj_p, H) bf16   O = [x | Ofixed | 0-pad]  (per-step block)
    mstack_ref,   # VMEM (2*N_rel_p, N_obj_p) bf16  [Msrc^T ; Mtgt^T]  (resident)
    mtgt_ref,     # VMEM (N_obj_p, N_rel_p) bf16                        (resident)
    w_ref,        # VMEM (8, H, H) bf16      padded weight slab          (resident)
    b_ref,        # VMEM (8, H)    f32       padded bias slab (+ t column row 4) (resident)
    p_ref,        # out  (N_obj_p, H) f32    P in columns [:d_P], zeros elsewhere
    *,
    n_rel,        # padded relation count (multiple of 8)
):
    f32 = jnp.float32
    bf16 = jnp.bfloat16

    step = pl.program_id(0)
    t = ts_ref[step]

    Opad = o_ref[...]
    Mstack = mstack_ref[...]
    Mtgt = mtgt_ref[...]
    B = b_ref[...]

    # Rstack = [Msrc^T ; Mtgt^T] @ O : one fused incidence matmul -> (2*N_rel_p, H) f32
    Rstack = jnp.dot(Mstack, Opad, preferred_element_type=f32)
    Rsrc = Rstack[:n_rel].astype(bf16)    # tile-aligned slice (n_rel % 8 == 0)
    Rtgt = Rstack[n_rel:].astype(bf16)

    # fR layer 0 on R' = [Rsrc | Rtgt | t], as a split matmul.
    # Time/bias folded once: trow = t * (W0 column acting on t) + b0.
    trow = t * B[4:5, :] + B[0:1, :]
    h = (
        jnp.dot(Rsrc, w_ref[0], preferred_element_type=f32)
        + jnp.dot(Rtgt, w_ref[1], preferred_element_type=f32)
        + trow
    )
    h = jnp.maximum(h, 0.0)

    # fR hidden layers 1..3 (ReLU)
    for i in range(3):
        h = jnp.dot(h.astype(bf16), w_ref[2 + i], preferred_element_type=f32) + B[1 + i : 2 + i, :]
        h = jnp.maximum(h, 0.0)

    # fR output layer (no ReLU) -> E, padded to H lanes (cols >= d_E are exactly 0)
    E = jnp.dot(h.astype(bf16), w_ref[5], preferred_element_type=f32) + B[5:6, :]

    # E' = Mtgt @ E : (N_obj_p, H); padded relation rows contribute nothing (zero cols)
    E_prime = jnp.dot(Mtgt, E.astype(bf16), preferred_element_type=f32)

    # fO: hidden (ReLU) + output, padded to H lanes (zeros propagate exactly)
    h2 = jnp.dot(E_prime.astype(bf16), w_ref[6], preferred_element_type=f32) + B[6:7, :]
    h2 = jnp.maximum(h2, 0.0)
    P = jnp.dot(h2.astype(bf16), w_ref[7], preferred_element_type=f32) + B[7:8, :]

    p_ref[...] = P.astype(p_ref.dtype)


# ---------------------------------------------------------------------------
# Parameter initialization (deterministic, PyTorch nn.Linear-style uniform)
# ---------------------------------------------------------------------------
def init_linear(key, d_in, d_out):
    k_w, k_b = jax.random.split(key)
    bound = 1.0 / math.sqrt(d_in)
    W = jax.random.uniform(k_w, (d_out, d_in), jnp.float32, -bound, bound)
    b = jax.random.uniform(k_b, (d_out,), jnp.float32, -bound, bound)
    return W, b


def init_mlp(key, d_in, hidden, d_out):
    dims = [d_in] + hidden + [d_out]
    keys = jax.random.split(key, len(dims) - 1)
    return [init_linear(k, di, do) for k, di, do in zip(keys, dims[:-1], dims[1:])]


def init_in_odefunc(key, d_O, d_P):
    d_E_hidden, d_E, d_P_hidden = 150, 50, 100
    k_r, k_o = jax.random.split(key)
    fR = init_mlp(k_r, 2 * d_O + 1, 4 * [d_E_hidden], d_E)   # 5 linears
    fO = init_mlp(k_o, d_E, 1 * [d_P_hidden], d_P)           # 2 linears
    return {"fR": fR, "fO": fO}


# ---------------------------------------------------------------------------
# Static packing of all weights/biases into two zero-padded slabs (done ONCE)
# ---------------------------------------------------------------------------
def pack_params(params, d_O):
    (W0, b0), (W1, b1), (W2, b2), (W3, b3), (W4, b4) = params["fR"]
    (U0, c0), (U1, c1) = params["fO"]
    d_P = U1.shape[0]

    # Split first fR weight along its input columns [Rsrc | Rtgt | t] and pre-transpose
    # everything so the kernel does plain (rows, in) @ (in, out).
    w0s = W0[:, :d_O].T            # (d_O, H)
    w0t = W0[:, d_O:2 * d_O].T     # (d_O, H)
    w0tm = W0[:, 2 * d_O]          # (H,)  column acting on t (kept f32 in bslab)

    def pad_w(a):
        return jnp.zeros((H, H), jnp.float32).at[: a.shape[0], : a.shape[1]].set(a)

    def pad_b(v):
        return jnp.zeros((H,), jnp.float32).at[: v.shape[0]].set(v)

    wslab = jnp.stack(
        [pad_w(w0s), pad_w(w0t), W1.T, W2.T, W3.T, pad_w(W4.T), pad_w(U0.T), pad_w(U1.T)]
    ).astype(jnp.bfloat16)  # (8, H, H) bf16: halves the dominant DMA, native MXU rate
    bslab = jnp.stack(
        [b0, b1, b2, b3, w0tm, pad_b(b4), pad_b(c0), pad_b(c1)]
    )  # (8, H) f32
    return wslab, bslab, d_P


# ---------------------------------------------------------------------------
# Module factory (set_fixed analogue): pack once, return jitted forward fns
# ---------------------------------------------------------------------------
def make_in_odefunc(params, Ofixed, Msrc, Mtgt, d_x):
    N_obj, N_rel = Msrc.shape
    d_fix = Ofixed.shape[1]
    d_O = d_x + d_fix

    wslab, bslab, d_P = pack_params(params, d_O)

    # Pad entity counts to multiples of 8 (exact no-ops: zero incidence rows/cols).
    N_obj_p = _round_up(N_obj, 8)
    N_rel_p = _round_up(N_rel, 8)
    assert N_rel_p % 8 == 0 and N_obj_p % 8 == 0

    Msrc_p = jnp.zeros((N_obj_p, N_rel_p), jnp.float32).at[:N_obj, :N_rel].set(
        Msrc.astype(jnp.float32))
    Mtgt_p = jnp.zeros((N_obj_p, N_rel_p), jnp.float32).at[:N_obj, :N_rel].set(
        Mtgt.astype(jnp.float32))
    # Pre-transpose + fuse incidence matrices (one MXU push for Rsrc/Rtgt); 0/1 exact in bf16.
    Mstack = jnp.concatenate([Msrc_p.T, Mtgt_p.T], axis=0).astype(jnp.bfloat16)  # (2*N_rel_p, N_obj_p)
    Mtgt_b = Mtgt_p.astype(jnp.bfloat16)

    # Ofixed pre-placed into the padded O slab once; only x is scattered per call.
    Obase = jnp.zeros((N_obj_p, H), jnp.float32).at[:N_obj, d_x:d_O].set(
        Ofixed.astype(jnp.float32))

    def forward_steps(ts, xs):
        """Evaluate the RHS at S (t, x) pairs in ONE pallas_call (weights DMA'd once)."""
        S = xs.shape[0]
        ts32 = jnp.asarray(ts, jnp.float32).reshape(S)

        Opad = jnp.broadcast_to(Obase[None], (S, N_obj_p, H))
        Opad = Opad.at[:, :N_obj, :d_x].set(xs.astype(jnp.float32))
        Opad = Opad.astype(jnp.bfloat16)

        per_step_flops = 2 * (
            (2 * N_rel_p) * N_obj_p * H      # Rstack
            + 2 * N_rel_p * H * H            # fR layer 0 (split matmul)
            + 3 * N_rel_p * H * H            # fR hidden layers 1..3
            + N_rel_p * H * H                # fR output layer (padded)
            + N_obj_p * N_rel_p * H          # Mtgt @ E
            + 2 * N_obj_p * H * H            # fO (padded)
        )
        bytes_accessed = (
            wslab.size * 2 + bslab.size * 4 + Mstack.size * 2 + Mtgt_b.size * 2  # resident, once
            + S * (N_obj_p * H * 2 + N_obj_p * H * 4 + 4)                        # per-step streams
        )

        p_pad = pl.pallas_call(
            functools.partial(in_odefunc_kernel, n_rel=N_rel_p),
            grid=(S,),
            in_specs=[
                # times: whole vector resident in SMEM, indexed by program_id
                pl.BlockSpec(memory_space=pltpu.MemorySpace.SMEM),
                # per-step O block
                pl.BlockSpec((None, N_obj_p, H), lambda s: (s, 0, 0)),
                # constant block index => fetched once, VMEM-resident across all steps
                pl.BlockSpec((2 * N_rel_p, N_obj_p), lambda s: (0, 0)),
                pl.BlockSpec((N_obj_p, N_rel_p), lambda s: (0, 0)),
                pl.BlockSpec((8, H, H), lambda s: (0, 0, 0)),
                pl.BlockSpec((8, H), lambda s: (0, 0)),
            ],
            out_specs=pl.BlockSpec((None, N_obj_p, H), lambda s: (s, 0, 0)),
            out_shape=jax.ShapeDtypeStruct((S, N_obj_p, H), jnp.float32),
            compiler_params=pltpu.CompilerParams(
                dimension_semantics=("parallel",),   # v7x: shard steps over 2 TCs
            ),
            cost_estimate=pl.CostEstimate(
                flops=S * per_step_flops, transcendentals=0, bytes_accessed=bytes_accessed
            ),
        )(ts32, Opad, Mstack, Mtgt_b, wslab, bslab)

        # Layout plumbing: drop row/lane padding.
        return p_pad[:, :N_obj, :d_P]

    forward_steps_jit = jax.jit(forward_steps)

    def forward(t, x):
        """Single RHS evaluation — matches the PyTorch forward(t, x)."""
        ts = jnp.asarray(t, jnp.float32).reshape(1)
        return forward_steps_jit(ts, x[None])[0]

    return forward, forward_steps_jit


# ---------------------------------------------------------------------------
# Pure-JAX reference (mirrors the PyTorch forward exactly, full f32)
# ---------------------------------------------------------------------------
def mlp_ref(layers, x):
    for W, b in layers[:-1]:
        x = jnp.maximum(x @ W.T + b, 0.0)
    W, b = layers[-1]
    return x @ W.T + b


def in_odefunc_ref(t, x, Ofixed, Msrc, Mtgt, params):
    O = jnp.concatenate([x, Ofixed], axis=1)
    Rsrc = Msrc.T @ O
    Rtgt = Mtgt.T @ O
    tt = jnp.ones_like(Rsrc[:, :1]) * t
    R_prime = jnp.concatenate([Rsrc, Rtgt, tt], axis=1)
    E = mlp_ref(params["fR"], R_prime)
    E_prime = Mtgt @ E
    return mlp_ref(params["fO"], E_prime)


# ---------------------------------------------------------------------------
if __name__ == "__main__":
    key = jax.random.PRNGKey(0)
    k_x, k_f, k_s, k_t, k_p, k_b = jax.random.split(key, 6)

    # Small problem: 8 objects, 16 relations, d_O = 4 + 2 = 6, d_P = 3.
    N_obj, N_rel = 8, 16
    d_x, d_fix, d_P = 4, 2, 3
    d_O = d_x + d_fix

    x = jax.random.normal(k_x, (N_obj, d_x), jnp.float32)
    Ofixed = jax.random.normal(k_f, (N_obj, d_fix), jnp.float32)
    Msrc = (jax.random.uniform(k_s, (N_obj, N_rel)) < 0.25).astype(jnp.float32)
    Mtgt = (jax.random.uniform(k_t, (N_obj, N_rel)) < 0.25).astype(jnp.float32)

    params = init_in_odefunc(k_p, d_O, d_P)

    # Pack everything once (set_fixed analogue), get jitted forward fns.
    forward, forward_steps = make_in_odefunc(params, Ofixed, Msrc, Mtgt, d_x)

    # Mixed precision (bf16 MXU operands, f32 accumulation) => compare at loose tolerance.
    RTOL = ATOL = 5e-2

    # 1) Single RHS eval (matches the PyTorch module forward(t, x)).
    t = 0.5
    P = jax.block_until_ready(forward(t, x))
    P_ref = in_odefunc_ref(jnp.float32(t), x, Ofixed, Msrc, Mtgt, params)
    np.testing.assert_allclose(np.asarray(P), np.asarray(P_ref), rtol=RTOL, atol=ATOL)

    # 2) Batched RHS evals (solver sub-steps) in one pallas_call; weights fetched once.
    S = 6
    ts = jnp.linspace(0.0, 1.0, S, dtype=jnp.float32)
    xs = x[None] + 0.05 * jax.random.normal(k_b, (S, N_obj, d_x), jnp.float32)
    Ps = jax.block_until_ready(forward_steps(ts, xs))
    for i in range(S):
        P_ref_i = in_odefunc_ref(ts[i], xs[i], Ofixed, Msrc, Mtgt, params)
        np.testing.assert_allclose(np.asarray(Ps[i]), np.asarray(P_ref_i), rtol=RTOL, atol=ATOL)

    print("KERNEL_OK")
</pallas_src>

<mosaic_0001>
module attributes {stable_mosaic.version = 11 : i64} {
  func.func @in_odefunc_kernel(%arg0: i32, %arg1: memref<1xf32, #tpu.memory_space<smem>>, %arg2: memref<1x8x150xbf16, #tpu.memory_space<vmem>>, %arg3: memref<32x8xbf16, #tpu.memory_space<vmem>>, %arg4: memref<8x16xbf16, #tpu.memory_space<vmem>>, %arg5: memref<8x150x150xbf16, #tpu.memory_space<vmem>>, %arg6: memref<8x150xf32, #tpu.memory_space<vmem>>, %arg7: memref<1x8x150xf32, #tpu.memory_space<vmem>>) attributes {dimension_semantics = [#tpu.dimension_semantics<parallel>], iteration_bounds = array<i64: 1>, scalar_prefetch = 0 : i64, scratch_operands = 0 : i64, tpu.core_type = #tpu.core_type<tc>, window_params = [{transform_indices = @transform_0, window_bounds = array<i64: 1>}, {transform_indices = @transform_1, window_bounds = array<i64: 1, 8, 150>}, {pipeline_mode = #tpu.pipeline_mode<synchronous>, transform_indices = @transform_2, window_bounds = array<i64: 32, 8>}, {pipeline_mode = #tpu.pipeline_mode<synchronous>, transform_indices = @transform_3, window_bounds = array<i64: 8, 16>}, {pipeline_mode = #tpu.pipeline_mode<synchronous>, transform_indices = @transform_4, window_bounds = array<i64: 8, 150, 150>}, {pipeline_mode = #tpu.pipeline_mode<synchronous>, transform_indices = @transform_5, window_bounds = array<i64: 8, 150>}, {transform_indices = @transform_6, window_bounds = array<i64: 1, 8, 150>}]} {
    %0 = arith.index_cast %arg0 : i32 to index
    %1 = memref.load %arg1[%0] : memref<1xf32, #tpu.memory_space<smem>>
    %c0 = arith.constant 0 : index
    %c0_0 = arith.constant 0 : index
    %c0_1 = arith.constant 0 : index
    %2 = vector.load %arg2[%c0, %c0_0, %c0_1] : memref<1x8x150xbf16, #tpu.memory_space<vmem>>, vector<1x8x150xbf16>
    %3 = vector.shape_cast %2 : vector<1x8x150xbf16> to vector<8x150xbf16>
    %c0_2 = arith.constant 0 : index
    %c0_3 = arith.constant 0 : index
    %4 = vector.load %arg3[%c0_2, %c0_3] : memref<32x8xbf16, #tpu.memory_space<vmem>>, vector<32x8xbf16>
    %c0_4 = arith.constant 0 : index
    %c0_5 = arith.constant 0 : index
    %5 = vector.load %arg4[%c0_4, %c0_5] : memref<8x16xbf16, #tpu.memory_space<vmem>>, vector<8x16xbf16>
    %c0_6 = arith.constant 0 : index
    %c0_7 = arith.constant 0 : index
    %6 = vector.load %arg6[%c0_6, %c0_7] : memref<8x150xf32, #tpu.memory_space<vmem>>, vector<8x150xf32>
    %cst = arith.constant dense<0.000000e+00> : vector<32x150xf32>
    %7 = tpu.matmul %4, %3, %cst {dimension_numbers = #tpu.dot_dimension_numbers<[1], [0], [0], [1], [0, 0, 1, 1], [], []>} : vector<32x8xbf16>, vector<8x150xbf16>, vector<32x150xf32> -> vector<32x150xf32>
    %8 = vector.extract_strided_slice %7 {offsets = [0, 0], sizes = [16, 150], strides = [1, 1]} : vector<32x150xf32> to vector<16x150xf32>
    %9 = arith.truncf %8 : vector<16x150xf32> to vector<16x150xbf16>
    %10 = vector.extract_strided_slice %7 {offsets = [16, 0], sizes = [16, 150], strides = [1, 1]} : vector<32x150xf32> to vector<16x150xf32>
    %11 = arith.truncf %10 : vector<16x150xf32> to vector<16x150xbf16>
    %12 = vector.extract_strided_slice %6 {offsets = [4, 0], sizes = [1, 150], strides = [1, 1]} : vector<8x150xf32> to vector<1x150xf32>
    %13 = vector.broadcast %1 : f32 to vector<1x150xf32>
    %14 = arith.mulf %13, %12 : vector<1x150xf32>
    %15 = vector.extract_strided_slice %6 {offsets = [0, 0], sizes = [1, 150], strides = [1, 1]} : vector<8x150xf32> to vector<1x150xf32>
    %16 = arith.addf %14, %15 : vector<1x150xf32>
    %c0_8 = arith.constant 0 : index
    %c0_9 = arith.constant 0 : index
    %c0_10 = arith.constant 0 : index
    %17 = vector.load %arg5[%c0_8, %c0_9, %c0_10] : memref<8x150x150xbf16, #tpu.memory_space<vmem>>, vector<1x150x150xbf16>
    %18 = vector.shape_cast %17 : vector<1x150x150xbf16> to vector<150x150xbf16>
    %cst_11 = arith.constant dense<0.000000e+00> : vector<16x150xf32>
    %19 = tpu.matmul %9, %18, %cst_11 {dimension_numbers = #tpu.dot_dimension_numbers<[1], [0], [0], [1], [0, 0, 1, 1], [], []>} : vector<16x150xbf16>, vector<150x150xbf16>, vector<16x150xf32> -> vector<16x150xf32>
    %c1 = arith.constant 1 : index
    %c0_12 = arith.constant 0 : index
    %c0_13 = arith.constant 0 : index
    %20 = vector.load %arg5[%c1, %c0_12, %c0_13] : memref<8x150x150xbf16, #tpu.memory_space<vmem>>, vector<1x150x150xbf16>
    %21 = vector.shape_cast %20 : vector<1x150x150xbf16> to vector<150x150xbf16>
    %cst_14 = arith.constant dense<0.000000e+00> : vector<16x150xf32>
    %22 = tpu.matmul %11, %21, %cst_14 {dimension_numbers = #tpu.dot_dimension_numbers<[1], [0], [0], [1], [0, 0, 1, 1], [], []>} : vector<16x150xbf16>, vector<150x150xbf16>, vector<16x150xf32> -> vector<16x150xf32>
    %23 = arith.addf %19, %22 : vector<16x150xf32>
    %24 = vector.broadcast %16 : vector<1x150xf32> to vector<16x150xf32>
    %25 = arith.addf %23, %24 : vector<16x150xf32>
    %cst_15 = arith.constant 0.000000e+00 : f32
    %26 = vector.broadcast %cst_15 : f32 to vector<16x150xf32>
    %27 = arith.maximumf %25, %26 : vector<16x150xf32>
    %28 = arith.truncf %27 : vector<16x150xf32> to vector<16x150xbf16>
    %c2 = arith.constant 2 : index
    %c0_16 = arith.constant 0 : index
    %c0_17 = arith.constant 0 : index
    %29 = vector.load %arg5[%c2, %c0_16, %c0_17] : memref<8x150x150xbf16, #tpu.memory_space<vmem>>, vector<1x150x150xbf16>
    %30 = vector.shape_cast %29 : vector<1x150x150xbf16> to vector<150x150xbf16>
    %cst_18 = arith.constant dense<0.000000e+00> : vector<16x150xf32>
    %31 = tpu.matmul %28, %30, %cst_18 {dimension_numbers = #tpu.dot_dimension_numbers<[1], [0], [0], [1], [0, 0, 1, 1], [], []>} : vector<16x150xbf16>, vector<150x150xbf16>, vector<16x150xf32> -> vector<16x150xf32>
    %32 = vector.extract_strided_slice %6 {offsets = [1, 0], sizes = [1, 150], strides = [1, 1]} : vector<8x150xf32> to vector<1x150xf32>
    %33 = vector.broadcast %32 : vector<1x150xf32> to vector<16x150xf32>
    %34 = arith.addf %31, %33 : vector<16x150xf32>
    %cst_19 = arith.constant 0.000000e+00 : f32
    %35 = vector.broadcast %cst_19 : f32 to vector<16x150xf32>
    %36 = arith.maximumf %34, %35 : vector<16x150xf32>
    %37 = arith.truncf %36 : vector<16x150xf32> to vector<16x150xbf16>
    %c3 = arith.constant 3 : index
    %c0_20 = arith.constant 0 : index
    %c0_21 = arith.constant 0 : index
    %38 = vector.load %arg5[%c3, %c0_20, %c0_21] : memref<8x150x150xbf16, #tpu.memory_space<vmem>>, vector<1x150x150xbf16>
    %39 = vector.shape_cast %38 : vector<1x150x150xbf16> to vector<150x150xbf16>
    %cst_22 = arith.constant dense<0.000000e+00> : vector<16x150xf32>
    %40 = tpu.matmul %37, %39, %cst_22 {dimension_numbers = #tpu.dot_dimension_numbers<[1], [0], [0], [1], [0, 0, 1, 1], [], []>} : vector<16x150xbf16>, vector<150x150xbf16>, vector<16x150xf32> -> vector<16x150xf32>
    %41 = vector.extract_strided_slice %6 {offsets = [2, 0], sizes = [1, 150], strides = [1, 1]} : vector<8x150xf32> to vector<1x150xf32>
    %42 = vector.broadcast %41 : vector<1x150xf32> to vector<16x150xf32>
    %43 = arith.addf %40, %42 : vector<16x150xf32>
    %cst_23 = arith.constant 0.000000e+00 : f32
    %44 = vector.broadcast %cst_23 : f32 to vector<16x150xf32>
    %45 = arith.maximumf %43, %44 : vector<16x150xf32>
    %46 = arith.truncf %45 : vector<16x150xf32> to vector<16x150xbf16>
    %c4 = arith.constant 4 : index
    %c0_24 = arith.constant 0 : index
    %c0_25 = arith.constant 0 : index
    %47 = vector.load %arg5[%c4, %c0_24, %c0_25] : memref<8x150x150xbf16, #tpu.memory_space<vmem>>, vector<1x150x150xbf16>
    %48 = vector.shape_cast %47 : vector<1x150x150xbf16> to vector<150x150xbf16>
    %cst_26 = arith.constant dense<0.000000e+00> : vector<16x150xf32>
    %49 = tpu.matmul %46, %48, %cst_26 {dimension_numbers = #tpu.dot_dimension_numbers<[1], [0], [0], [1], [0, 0, 1, 1], [], []>} : vector<16x150xbf16>, vector<150x150xbf16>, vector<16x150xf32> -> vector<16x150xf32>
    %50 = vector.extract_strided_slice %6 {offsets = [3, 0], sizes = [1, 150], strides = [1, 1]} : vector<8x150xf32> to vector<1x150xf32>
    %51 = vector.broadcast %50 : vector<1x150xf32> to vector<16x150xf32>
    %52 = arith.addf %49, %51 : vector<16x150xf32>
    %cst_27 = arith.constant 0.000000e+00 : f32
    %53 = vector.broadcast %cst_27 : f32 to vector<16x150xf32>
    %54 = arith.maximumf %52, %53 : vector<16x150xf32>
    %55 = arith.truncf %54 : vector<16x150xf32> to vector<16x150xbf16>
    %c5 = arith.constant 5 : index
    %c0_28 = arith.constant 0 : index
    %c0_29 = arith.constant 0 : index
    %56 = vector.load %arg5[%c5, %c0_28, %c0_29] : memref<8x150x150xbf16, #tpu.memory_space<vmem>>, vector<1x150x150xbf16>
    %57 = vector.shape_cast %56 : vector<1x150x150xbf16> to vector<150x150xbf16>
    %cst_30 = arith.constant dense<0.000000e+00> : vector<16x150xf32>
    %58 = tpu.matmul %55, %57, %cst_30 {dimension_numbers = #tpu.dot_dimension_numbers<[1], [0], [0], [1], [0, 0, 1, 1], [], []>} : vector<16x150xbf16>, vector<150x150xbf16>, vector<16x150xf32> -> vector<16x150xf32>
    %59 = vector.extract_strided_slice %6 {offsets = [5, 0], sizes = [1, 150], strides = [1, 1]} : vector<8x150xf32> to vector<1x150xf32>
    %60 = vector.broadcast %59 : vector<1x150xf32> to vector<16x150xf32>
    %61 = arith.addf %58, %60 : vector<16x150xf32>
    %62 = arith.truncf %61 : vector<16x150xf32> to vector<16x150xbf16>
    %cst_31 = arith.constant dense<0.000000e+00> : vector<8x150xf32>
    %63 = tpu.matmul %5, %62, %cst_31 {dimension_numbers = #tpu.dot_dimension_numbers<[1], [0], [0], [1], [0, 0, 1, 1], [], []>} : vector<8x16xbf16>, vector<16x150xbf16>, vector<8x150xf32> -> vector<8x150xf32>
    %64 = arith.truncf %63 : vector<8x150xf32> to vector<8x150xbf16>
    %c6 = arith.constant 6 : index
    %c0_32 = arith.constant 0 : index
    %c0_33 = arith.constant 0 : index
    %65 = vector.load %arg5[%c6, %c0_32, %c0_33] : memref<8x150x150xbf16, #tpu.memory_space<vmem>>, vector<1x150x150xbf16>
    %66 = vector.shape_cast %65 : vector<1x150x150xbf16> to vector<150x150xbf16>
    %cst_34 = arith.constant dense<0.000000e+00> : vector<8x150xf32>
    %67 = tpu.matmul %64, %66, %cst_34 {dimension_numbers = #tpu.dot_dimension_numbers<[1], [0], [0], [1], [0, 0, 1, 1], [], []>} : vector<8x150xbf16>, vector<150x150xbf16>, vector<8x150xf32> -> vector<8x150xf32>
    %68 = vector.extract_strided_slice %6 {offsets = [6, 0], sizes = [1, 150], strides = [1, 1]} : vector<8x150xf32> to vector<1x150xf32>
    %69 = vector.broadcast %68 : vector<1x150xf32> to vector<8x150xf32>
    %70 = arith.addf %67, %69 : vector<8x150xf32>
    %cst_35 = arith.constant 0.000000e+00 : f32
    %71 = vector.broadcast %cst_35 : f32 to vector<8x150xf32>
    %72 = arith.maximumf %70, %71 : vector<8x150xf32>
    %73 = arith.truncf %72 : vector<8x150xf32> to vector<8x150xbf16>
    %c7 = arith.constant 7 : index
    %c0_36 = arith.constant 0 : index
    %c0_37 = arith.constant 0 : index
    %74 = vector.load %arg5[%c7, %c0_36, %c0_37] : memref<8x150x150xbf16, #tpu.memory_space<vmem>>, vector<1x150x150xbf16>
    %75 = vector.shape_cast %74 : vector<1x150x150xbf16> to vector<150x150xbf16>
    %cst_38 = arith.constant dense<0.000000e+00> : vector<8x150xf32>
    %76 = tpu.matmul %73, %75, %cst_38 {dimension_numbers = #tpu.dot_dimension_numbers<[1], [0], [0], [1], [0, 0, 1, 1], [], []>} : vector<8x150xbf16>, vector<150x150xbf16>, vector<8x150xf32> -> vector<8x150xf32>
    %77 = vector.extract_strided_slice %6 {offsets = [7, 0], sizes = [1, 150], strides = [1, 1]} : vector<8x150xf32> to vector<1x150xf32>
    %78 = vector.broadcast %77 : vector<1x150xf32> to vector<8x150xf32>
    %79 = arith.addf %76, %78 : vector<8x150xf32>
    %c0_39 = arith.constant 0 : index
    %c0_40 = arith.constant 0 : index
    %c0_41 = arith.constant 0 : index
    %80 = vector.load %arg7[%c0_39, %c0_40, %c0_41] : memref<1x8x150xf32, #tpu.memory_space<vmem>>, vector<1x8x150xf32>
    %81 = vector.shape_cast %80 : vector<1x8x150xf32> to vector<8x150xf32>
    %82 = vector.shape_cast %79 : vector<8x150xf32> to vector<1x8x150xf32>
    tpu.vector_store %arg7[%c0_39, %c0_40, %c0_41], %82 {strides = array<i32>} : memref<1x8x150xf32, #tpu.memory_space<vmem>>, vector<1x8x150xf32>,
    return
  }
  func.func @transform_0(%arg0: i32) -> i32 {
    %c0_i32 = arith.constant 0 : i32
    %c0_i32_0 = arith.constant 0 : i32
    return %c0_i32 : i32
  }
  func.func @transform_1(%arg0: i32) -> (i32, i32, i32) {
    %c0_i32 = arith.constant 0 : i32
    %c0_i32_0 = arith.constant 0 : i32
    %c0_i32_1 = arith.constant 0 : i32
    return %arg0, %c0_i32, %c0_i32_0 : i32, i32, i32
  }
  func.func @transform_2(%arg0: i32) -> (i32, i32) {
    %c0_i32 = arith.constant 0 : i32
    %c0_i32_0 = arith.constant 0 : i32
    %c0_i32_1 = arith.constant 0 : i32
    return %c0_i32, %c0_i32_0 : i32, i32
  }
  func.func @transform_3(%arg0: i32) -> (i32, i32) {
    %c0_i32 = arith.constant 0 : i32
    %c0_i32_0 = arith.constant 0 : i32
    %c0_i32_1 = arith.constant 0 : i32
    return %c0_i32, %c0_i32_0 : i32, i32
  }
  func.func @transform_4(%arg0: i32) -> (i32, i32, i32) {
    %c0_i32 = arith.constant 0 : i32
    %c0_i32_0 = arith.constant 0 : i32
    %c0_i32_1 = arith.constant 0 : i32
    %c0_i32_2 = arith.constant 0 : i32
    return %c0_i32, %c0_i32_0, %c0_i32_1 : i32, i32, i32
  }
  func.func @transform_5(%arg0: i32) -> (i32, i32) {
    %c0_i32 = arith.constant 0 : i32
    %c0_i32_0 = arith.constant 0 : i32
    %c0_i32_1 = arith.constant 0 : i32
    return %c0_i32, %c0_i32_0 : i32, i32
  }
  func.func @transform_6(%arg0: i32) -> (i32, i32, i32) {
    %c0_i32 = arith.constant 0 : i32
    %c0_i32_0 = arith.constant 0 : i32
    %c0_i32_1 = arith.constant 0 : i32
    return %arg0, %c0_i32, %c0_i32_0 : i32, i32, i32
  }
}

</mosaic_0001>

<llo_original>
// kernel: forward_steps.1
$region0: #{forward_steps.1}
  #allocation0 [shape = 'u32[]', space=smem, size = 0x4, offset = 0x4, fixed_abs, tag = 'smem constant byte address 0x4 - core index']
  #allocation1 [shape = 'u32[144,128]{1,0:T(1,128)}', space=vmem, size = 0x12000, scoped, tag = 'internal scratch']
  #allocation2 [shape = 'f32[1]{0:T(128)S(6)}', space=smem, size = 0x200, scoped, tag = 'scoped memory for forward_steps.1']
  %s0 = inlined_call_operand.<no memory space> [shape: f32[1], index: 0, kind: input, shape index: {}]
  %s1 = inlined_call_operand.vmem [shape: bf16[1,8,150], index: 1, kind: input, shape index: {}]
  %s2 = inlined_call_operand.hbm [shape: bf16[32,8], index: 2, kind: input, shape index: {}]
  %s3 = inlined_call_operand.vmem [shape: bf16[8,16], index: 3, kind: input, shape index: {}]
  %s4 = inlined_call_operand.hbm [shape: bf16[8,150,150], index: 4, kind: input, shape index: {}]
  %s5 = inlined_call_operand.vmem [shape: f32[8,150], index: 5, kind: input, shape index: {}]
  %s6 = inlined_call_operand.vmem [shape: f32[1,8,150], index: 6, kind: output, shape index: {}]
  %s7 = sld [smem:[#allocation0]]
  $region42: #{forward_steps.1} parent=0
    _
  %s9 = ssub.s32 1, %s7
  %s10 = scalar_select 0, %s9, %s7
  %11 = sst [smem:[#allocation2]] %s0
  $region1: #{forward_steps.1} parent=0
    #allocation3 [shape = 'u8[8192]{0}', space=vmem, size = 0x2000, scoped, tag = 'input window, operand 2, single buffered']
    #allocation4 [shape = 's32[1]{0}', space=sflag, size = 0x4, scoped, tag = 'scoped memory for forward_steps.1']
    #allocation5 [shape = 'u8[622592]{0}', space=vmem, size = 0x98000, scoped, tag = 'input window, operand 4, single buffered']
    #allocation6 [shape = 's32[1]{0}', space=sflag, size = 0x4, scoped, tag = 'scoped memory for forward_steps.1']
    %12 = vsyncpa [#allocation4], 0
    %13 = vsyncpa [#allocation6], 0
    // Predicated region
    $region2: #{forward_steps.1} parent=1 // pred_check
      _
    $region3: #{forward_steps.1} parent=1 // pred_check_branch
      %15 = sbr.rel (0) target = $region5
    $region4: #{forward_steps.1} parent=1 // pred_region
      _
    $region5: #{forward_steps.1} parent=1 // pred_fallthru
      _
    // Predicated region
    $region6: #{forward_steps.1} parent=1 // pred_check
      _
    $region7: #{forward_steps.1} parent=1 // pred_check_branch
      %17 = sbr.rel (0) target = $region9
    $region8: #{forward_steps.1} parent=1 // pred_region
      _
    $region9: #{forward_steps.1} parent=1 // pred_fallthru
      _
    // Predicated region
    $region10: #{forward_steps.1} parent=1 // pred_check
      _
    $region11: #{forward_steps.1} parent=1 // pred_check_branch
      %19 = sbr.rel (0) target = $region13
    $region12: #{forward_steps.1} parent=1 // pred_region
      %s21 = ssub.s32 256, 256
      %22 = vsyncadd [#allocation4], %s21
      %s23 = sshll.u32 [#allocation3], 4
      %s24 = int_to_ptr.vmem [resolvable:$true] %s23
      %29 = dma.hbm_to_vmem [thread:$0]  %s2, 256, %s24, [#allocation4], 64, 64, 4
    $region13: #{forward_steps.1} parent=1 // pred_fallthru
      _
    // Predicated region
    $region14: #{forward_steps.1} parent=1 // pred_check
      _
    $region15: #{forward_steps.1} parent=1 // pred_check_branch
      %31 = sbr.rel (0) target = $region17
    $region16: #{forward_steps.1} parent=1 // pred_region
      _
    $region17: #{forward_steps.1} parent=1 // pred_fallthru
      _
    // Predicated region
    $region18: #{forward_steps.1} parent=1 // pred_check
      _
    $region19: #{forward_steps.1} parent=1 // pred_check_branch
      %33 = sbr.rel (0) target = $region21
    $region20: #{forward_steps.1} parent=1 // pred_region
      %s35 = ssub.s32 19456, 19456
      %36 = vsyncadd [#allocation6], %s35
      %s37 = sshll.u32 [#allocation5], 4
      %s38 = int_to_ptr.vmem [resolvable:$true] %s37
      %43 = dma.hbm_to_vmem [thread:$0]  %s4, 19456, %s38, [#allocation6], 128, 128, 8
    $region21: #{forward_steps.1} parent=1 // pred_fallthru
      _
    // Predicated region
    $region22: #{forward_steps.1} parent=1 // pred_check
      _
    $region23: #{forward_steps.1} parent=1 // pred_check_branch
      %45 = sbr.rel (0) target = $region25
    $region24: #{forward_steps.1} parent=1 // pred_region
      _
    $region25: #{forward_steps.1} parent=1 // pred_fallthru
      _
    // Predicated region
    $region26: #{forward_steps.1} parent=1 // pred_check
      _
    $region27: #{forward_steps.1} parent=1 // pred_check_branch
      %47 = sbr.rel (0) target = $region29
    $region28: #{forward_steps.1} parent=1 // pred_region
      %48 = dma.done [#allocation4], 256
    $region29: #{forward_steps.1} parent=1 // pred_fallthru
      _
    // Predicated region
    $region30: #{forward_steps.1} parent=1 // pred_check
      _
    $region31: #{forward_steps.1} parent=1 // pred_check_branch
      %50 = sbr.rel (0) target = $region33
    $region32: #{forward_steps.1} parent=1 // pred_region
      %51 = dma.done [#allocation6], 19456
    $region33: #{forward_steps.1} parent=1 // pred_fallthru
      _
    %s53 = sld [smem:[#allocation2]]
    %v54 = vld [vmem:[%s1] sm:$0xff]
    %v55 = vld [vmem:[#allocation3] sm:$0xf]
    %v56 = vld [vmem:[#allocation3 + $0x4] sm:$0xf]
    %v57 = vld [vmem:[#allocation3 + $0x8] sm:$0xf]
    %v58 = vld [vmem:[#allocation3 + $0xc] sm:$0xf]
    %v59 = vld [vmem:[%s3] sm:$0xf]
    %v60 = vld [vmem:[%s5] sm:$0xff]
    %v61 = vld [vmem:[%s5 + $0x8] sm:$0xff]
    %v66 = vunpack.c.l.b16 %v55
    %v67 = vunpack.c.l.b16 %v56
    %v68 = vunpack.c.l.b16 %v57
    %v69 = vunpack.c.l.b16 %v58
    %v70 = vpack.c.b16 %v67, %v66
    %v71 = vpack.c.b16 %v69, %v68
    %v73 = vunpack.c.l.b16 %v54
    %v74 = vunpack.c.h.b16 %v54
    %v75 = vpack.c.b16 %v73, %v73
    %v76 = vpack.c.b16 %v74, %v74
    %vm77 = vcmask 64512
    %v79 = vsel %vm77, %v70, 0
    %v82 = vsel %vm77, %v71, 0
    %vm84 = vcmask 1043456
    %v86 = vsel %vm84, %v75, 0
    %v89 = vsel %vm84, %v76, 0
    %91 = vmatprep.subr.bf16.mxu0 0
    %92 = vmatpush1.bf16.msra.mxu0 0
    %93 = vmatprep.subr.bf16.mxu0 0
    %94 = vmatpush1.bf16.msra.mxu0 0
    %95 = vmatprep.subr.bf16.mxu0 0
    %96 = vmatpush1.bf16.msra.mxu0 0
    %97 = vmatprep.subr.bf16.mxu0 0
    %98 = vmatpush1.bf16.msra.mxu0 0
    %99 = vmatprep.subr.bf16.mxu0 0
    %100 = vmatpush1.bf16.msra.mxu0 0
    %101 = vmatprep.subr.bf16.mxu0 0
    %102 = vmatpush1.bf16.msra.mxu0 0
    %103 = vmatprep.subr.bf16.mxu0 0
    %104 = vmatpush1.bf16.msra.mxu0 0
    %105 = vmatprep.subr.bf16.mxu0 %v89
    %106 = vmatpush1.bf16.msra.mxu0 %v86
    %107 = vmatprep.subr.bf16.mxu0 0
    %108 = vmatpush2.bf16.msra.mxu0 0
    %109 = vmatprep.subr.bf16.mxu0 0
    %110 = vmatpush2.bf16.msra.mxu0 0
    %111 = vmatprep.subr.bf16.mxu0 0
    %112 = vmatpush2.bf16.msra.mxu0 0
    %113 = vmatprep.subr.bf16.mxu0 0
    %114 = vmatpush2.bf16.msra.mxu0 0
    %115 = vmatprep.subr.bf16.mxu0 0
    %116 = vmatpush2.bf16.msra.mxu0 0
    %117 = vmatprep.subr.bf16.mxu0 0
    %118 = vmatpush2.bf16.msra.mxu0 0
    %119 = vmatprep.subr.bf16.mxu0 0
    %120 = vmatpush2.bf16.msra.mxu0 0
    %121 = vmatprep.subr.bf16.mxu0 0
    %122 = vmatpush2.bf16.msra.mxu0 0
    %123 = vmatprep.mubr.bf16.mxu0 0
    %124 = vmatmul.mubr.bf16.gmra.mxu0 %v79
    %v125 = vpop.f32.mrf.mxu0
    %v126 = vadd.f32 0.0, %v125
    %v127 = vpop.f32.mrf.mxu0
    %v128 = vadd.f32 0.0, %v127
    %v129 = vpop.f32.mrf.mxu0
    %v130 = vadd.f32 0.0, %v129
    %v131 = vpop.f32.mrf.mxu0
    %v132 = vadd.f32 0.0, %v131
    %133 = vmatprep.mubr.bf16.mxu0 0
    %134 = vmatmul.mubr.bf16.gmra.mxu0 %v82
    %v135 = vpop.f32.mrf.mxu0
    %v136 = vadd.f32 0.0, %v135
    %v137 = vpop.f32.mrf.mxu0
    %v138 = vadd.f32 0.0, %v137
    %v139 = vpop.f32.mrf.mxu0
    %v140 = vadd.f32 0.0, %v139
    %v141 = vpop.f32.mrf.mxu0
    %v142 = vadd.f32 0.0, %v141
    %143 = vdwg.mxu0
    %v144 = vpack.c.bf16 %v130, %v126
    %v145 = vpack.c.bf16 %v132, %v128
    %v146 = vpack.c.bf16 %v140, %v136
    %v147 = vpack.c.bf16 %v142, %v138
    %v148 = vstv %s53
    %v149 = vmul.f32 %v148, %v60
    %v150 = vmul.f32 %v148, %v61
    %v153 = vrot.slane %v60, 4
    %v154 = vrot.slane %v61, 4
    %v157 = vadd.f32 %v149, %v153
    %v158 = vadd.f32 %v150, %v154
    %v159 = vld [vmem:[#allocation5] sm:$0xff]
    %v160 = vld [vmem:[#allocation5 + $0x8] sm:$0xff]
    %v161 = vld [vmem:[#allocation5 + $0x10] sm:$0xff]
    %v162 = vld [vmem:[#allocation5 + $0x18] sm:$0xff]
    %v163 = vld [vmem:[#allocation5 + $0x20] sm:$0xff]
    %v164 = vld [vmem:[#allocation5 + $0x28] sm:$0xff]
    %v165 = vld [vmem:[#allocation5 + $0x30] sm:$0xff]
    %v166 = vld [vmem:[#allocation5 + $0x38] sm:$0xff]
    %v167 = vld [vmem:[#allocation5 + $0x40] sm:$0xff]
    %v168 = vld [vmem:[#allocation5 + $0x48] sm:$0xff]
    %v169 = vld [vmem:[#allocation5 + $0x50] sm:$0xff]
    %v170 = vld [vmem:[#allocation5 + $0x58] sm:$0xff]
    %v171 = vld [vmem:[#allocation5 + $0x60] sm:$0xff]
    %v172 = vld [vmem:[#allocation5 + $0x68] sm:$0xff]
    %v173 = vld [vmem:[#allocation5 + $0x70] sm:$0xff]
    %v174 = vld [vmem:[#allocation5 + $0x78] sm:$0xff]
    %v175 = vld [vmem:[#allocation5 + $0x80] sm:$0xff]
    %v176 = vld [vmem:[#allocation5 + $0x88] sm:$0xff]
    %v177 = vld [vmem:[#allocation5 + $0x90] sm:$0x77]
    %s178 = scalar_lea.vmem [#allocation5], 152
    %v179 = vld [vmem:[%s178] sm:$0xff]
    %v180 = vld [vmem:[%s178 + $0x8] sm:$0xff]
    %v181 = vld [vmem:[%s178 + $0x10] sm:$0xff]
    %v182 = vld [vmem:[%s178 + $0x18] sm:$0xff]
    %v183 = vld [vmem:[%s178 + $0x20] sm:$0xff]
    %v184 = vld [vmem:[%s178 + $0x28] sm:$0xff]
    %v185 = vld [vmem:[%s178 + $0x30] sm:$0xff]
    %v186 = vld [vmem:[%s178 + $0x38] sm:$0xff]
    %v187 = vld [vmem:[%s178 + $0x40] sm:$0xff]
    %v188 = vld [vmem:[%s178 + $0x48] sm:$0xff]
    %v189 = vld [vmem:[%s178 + $0x50] sm:$0xff]
    %v190 = vld [vmem:[%s178 + $0x58] sm:$0xff]
    %v191 = vld [vmem:[%s178 + $0x60] sm:$0xff]
    %v192 = vld [vmem:[%s178 + $0x68] sm:$0xff]
    %v193 = vld [vmem:[%s178 + $0x70] sm:$0xff]
    %v194 = vld [vmem:[%s178 + $0x78] sm:$0xff]
    %v195 = vld [vmem:[%s178 + $0x80] sm:$0xff]
    %v196 = vld [vmem:[%s178 + $0x88] sm:$0xff]
    %v197 = vld [vmem:[%s178 + $0x90] sm:$0x77]
    %v217 = vunpack.c.l.b16 %v179
    %v218 = vunpack.c.h.b16 %v179
    %v219 = vunpack.c.l.b16 %v180
    %v220 = vunpack.c.h.b16 %v180
    %v221 = vunpack.c.l.b16 %v181
    %v222 = vunpack.c.h.b16 %v181
    %v223 = vunpack.c.l.b16 %v182
    %v224 = vunpack.c.h.b16 %v182
    %v225 = vunpack.c.l.b16 %v183
    %v226 = vunpack.c.h.b16 %v183
    %v227 = vunpack.c.l.b16 %v184
    %v228 = vunpack.c.h.b16 %v184
    %v229 = vunpack.c.l.b16 %v185
    %v230 = vunpack.c.h.b16 %v185
    %v231 = vunpack.c.l.b16 %v186
    %v232 = vunpack.c.h.b16 %v186
    %v233 = vunpack.c.l.b16 %v187
    %v234 = vunpack.c.h.b16 %v187
    %v235 = vunpack.c.l.b16 %v188
    %v236 = vunpack.c.h.b16 %v188
    %v237 = vunpack.c.l.b16 %v189
    %v238 = vunpack.c.h.b16 %v189
    %v239 = vunpack.c.l.b16 %v190
    %v240 = vunpack.c.h.b16 %v190
    %v241 = vunpack.c.l.b16 %v191
    %v242 = vunpack.c.h.b16 %v191
    %v243 = vunpack.c.l.b16 %v192
    %v244 = vunpack.c.h.b16 %v192
    %v245 = vunpack.c.l.b16 %v193
    %v246 = vunpack.c.h.b16 %v193
    %v247 = vunpack.c.l.b16 %v194
    %v248 = vunpack.c.h.b16 %v194
    %v249 = vunpack.c.l.b16 %v195
    %v250 = vunpack.c.h.b16 %v195
    %v251 = vunpack.c.l.b16 %v196
    %v252 = vunpack.c.h.b16 %v196
    %v253 = vunpack.c.l.b16 %v197
    %v254 = vunpack.c.h.b16 %v197
    %v255 = vpack.c.b16 %v219, %v217
    %v256 = vpack.c.b16 %v220, %v218
    %v257 = vpack.c.b16 %v223, %v221
    %v258 = vpack.c.b16 %v224, %v222
    %v259 = vpack.c.b16 %v227, %v225
    %v260 = vpack.c.b16 %v228, %v226
    %v261 = vpack.c.b16 %v231, %v229
    %v262 = vpack.c.b16 %v232, %v230
    %v263 = vpack.c.b16 %v235, %v233
    %v264 = vpack.c.b16 %v236, %v234
    %v265 = vpack.c.b16 %v239, %v237
    %v266 = vpack.c.b16 %v240, %v238
    %v267 = vpack.c.b16 %v243, %v241
    %v268 = vpack.c.b16 %v244, %v242
    %v269 = vpack.c.b16 %v247, %v245
    %v270 = vpack.c.b16 %v248, %v246
    %v271 = vpack.c.b16 %v251, %v249
    %v272 = vpack.c.b16 %v252, %v250
    %v273 = vpack.c.b16 %v253, %v253
    %v274 = vpack.c.b16 %v254, %v254
    %vm293 = vcmask 179200
    %v295 = vsel %vm293, %v147, 0
    %vm297 = vcmask 1042432
    %v299 = vsel %vm297, %v273, 0
    %v302 = vsel %vm297, %v274, 0
    %304 = vmatprep.subr.bf16.mxu0 %v270
    %305 = vmatpush1.bf16.msra.mxu0 %v269
    %306 = vmatprep.subr.bf16.mxu0 %v268
    %307 = vmatpush1.bf16.msra.mxu0 %v267
    %308 = vmatprep.subr.bf16.mxu0 %v266
    %309 = vmatpush1.bf16.msra.mxu0 %v265
    %310 = vmatprep.subr.bf16.mxu0 %v264
    %311 = vmatpush1.bf16.msra.mxu0 %v263
    %312 = vmatprep.subr.bf16.mxu0 %v262
    %313 = vmatpush1.bf16.msra.mxu0 %v261
    %314 = vmatprep.subr.bf16.mxu0 %v260
    %315 = vmatpush1.bf16.msra.mxu0 %v259
    %316 = vmatprep.subr.bf16.mxu0 %v258
    %317 = vmatpush1.bf16.msra.mxu0 %v257
    %318 = vmatprep.subr.bf16.mxu0 %v256
    %319 = vmatpush1.bf16.msra.mxu0 %v255
    %320 = vmatprep.subr.bf16.mxu0 0
    %321 = vmatpush2.bf16.msra.mxu0 0
    %322 = vmatprep.subr.bf16.mxu0 0
    %323 = vmatpush2.bf16.msra.mxu0 0
    %324 = vmatprep.subr.bf16.mxu0 0
    %325 = vmatpush2.bf16.msra.mxu0 0
    %326 = vmatprep.subr.bf16.mxu0 0
    %327 = vmatpush2.bf16.msra.mxu0 0
    %328 = vmatprep.subr.bf16.mxu0 0
    %329 = vmatpush2.bf16.msra.mxu0 0
    %330 = vmatprep.subr.bf16.mxu0 0
    %331 = vmatpush2.bf16.msra.mxu0 0
    %332 = vmatprep.subr.bf16.mxu0 %v302
    %333 = vmatpush2.bf16.msra.mxu0 %v299
    %334 = vmatprep.subr.bf16.mxu0 %v272
    %335 = vmatpush2.bf16.msra.mxu0 %v271
    %336 = vmatprep.mubr.bf16.mxu0 %v295
    %337 = vmatmul.mubr.bf16.gmra.mxu0 %v146
    %v338 = vpop.f32.mrf.mxu0
    %v339 = vadd.f32 0.0, %v338
    %v340 = vpop.f32.mrf.mxu0
    %v341 = vadd.f32 0.0, %v340
    %v342 = vpop.f32.mrf.mxu0
    %v343 = vadd.f32 0.0, %v342
    %v344 = vpop.f32.mrf.mxu0
    %v345 = vadd.f32 0.0, %v344
    %346 = vdwg.mxu0
    %v366 = vunpack.c.l.b16 %v159
    %v367 = vunpack.c.h.b16 %v159
    %v368 = vunpack.c.l.b16 %v160
    %v369 = vunpack.c.h.b16 %v160
    %v370 = vunpack.c.l.b16 %v161
    %v371 = vunpack.c.h.b16 %v161
    %v372 = vunpack.c.l.b16 %v162
    %v373 = vunpack.c.h.b16 %v162
    %v374 = vunpack.c.l.b16 %v163
    %v375 = vunpack.c.h.b16 %v163
    %v376 = vunpack.c.l.b16 %v164
    %v377 = vunpack.c.h.b16 %v164
    %v378 = vunpack.c.l.b16 %v165
    %v379 = vunpack.c.h.b16 %v165
    %v380 = vunpack.c.l.b16 %v166
    %v381 = vunpack.c.h.b16 %v166
    %v382 = vunpack.c.l.b16 %v167
    %v383 = vunpack.c.h.b16 %v167
    %v384 = vunpack.c.l.b16 %v168
    %v385 = vunpack.c.h.b16 %v168
    %v386 = vunpack.c.l.b16 %v169
    %v387 = vunpack.c.h.b16 %v169
    %v388 = vunpack.c.l.b16 %v170
    %v389 = vunpack.c.h.b16 %v170
    %v390 = vunpack.c.l.b16 %v171
    %v391 = vunpack.c.h.b16 %v171
    %v392 = vunpack.c.l.b16 %v172
    %v393 = vunpack.c.h.b16 %v172
    %v394 = vunpack.c.l.b16 %v173
    %v395 = vunpack.c.h.b16 %v173
    %v396 = vunpack.c.l.b16 %v174
    %v397 = vunpack.c.h.b16 %v174
    %v398 = vunpack.c.l.b16 %v175
    %v399 = vunpack.c.h.b16 %v175
    %v400 = vunpack.c.l.b16 %v176
    %v401 = vunpack.c.h.b16 %v176
    %v402 = vunpack.c.l.b16 %v177
    %v403 = vunpack.c.h.b16 %v177
    %v404 = vpack.c.b16 %v368, %v366
    %v405 = vpack.c.b16 %v369, %v367
    %v406 = vpack.c.b16 %v372, %v370
    %v407 = vpack.c.b16 %v373, %v371
    %v408 = vpack.c.b16 %v376, %v374
    %v409 = vpack.c.b16 %v377, %v375
    %v410 = vpack.c.b16 %v380, %v378
    %v411 = vpack.c.b16 %v381, %v379
    %v412 = vpack.c.b16 %v384, %v382
    %v413 = vpack.c.b16 %v385, %v383
    %v414 = vpack.c.b16 %v388, %v386
    %v415 = vpack.c.b16 %v389, %v387
    %v416 = vpack.c.b16 %v392, %v390
    %v417 = vpack.c.b16 %v393, %v391
    %v418 = vpack.c.b16 %v396, %v394
    %v419 = vpack.c.b16 %v397, %v395
    %v420 = vpack.c.b16 %v400, %v398
    %v421 = vpack.c.b16 %v401, %v399
    %v422 = vpack.c.b16 %v402, %v402
    %v423 = vpack.c.b16 %v403, %v403
    %v443 = vsel %vm293, %v145, 0
    %v446 = vsel %vm297, %v422, 0
    %v449 = vsel %vm297, %v423, 0
    %451 = vmatprep.subr.bf16.mxu0 %v419
    %452 = vmatpush1.bf16.msra.mxu0 %v418
    %453 = vmatprep.subr.bf16.mxu0 %v417
    %454 = vmatpush1.bf16.msra.mxu0 %v416
    %455 = vmatprep.subr.bf16.mxu0 %v415
    %456 = vmatpush1.bf16.msra.mxu0 %v414
    %457 = vmatprep.subr.bf16.mxu0 %v413
    %458 = vmatpush1.bf16.msra.mxu0 %v412
    %459 = vmatprep.subr.bf16.mxu0 %v411
    %460 = vmatpush1.bf16.msra.mxu0 %v410
    %461 = vmatprep.subr.bf16.mxu0 %v409
    %462 = vmatpush1.bf16.msra.mxu0 %v408
    %463 = vmatprep.subr.bf16.mxu0 %v407
    %464 = vmatpush1.bf16.msra.mxu0 %v406
    %465 = vmatprep.subr.bf16.mxu0 %v405
    %466 = vmatpush1.bf16.msra.mxu0 %v404
    %467 = vmatprep.subr.bf16.mxu0 0
    %468 = vmatpush2.bf16.msra.mxu0 0
    %469 = vmatprep.subr.bf16.mxu0 0
    %470 = vmatpush2.bf16.msra.mxu0 0
    %471 = vmatprep.subr.bf16.mxu0 0
    %472 = vmatpush2.bf16.msra.mxu0 0
    %473 = vmatprep.subr.bf16.mxu0 0
    %474 = vmatpush2.bf16.msra.mxu0 0
    %475 = vmatprep.subr.bf16.mxu0 0
    %476 = vmatpush2.bf16.msra.mxu0 0
    %477 = vmatprep.subr.bf16.mxu0 0
    %478 = vmatpush2.bf16.msra.mxu0 0
    %479 = vmatprep.subr.bf16.mxu0 %v449
    %480 = vmatpush2.bf16.msra.mxu0 %v446
    %481 = vmatprep.subr.bf16.mxu0 %v421
    %482 = vmatpush2.bf16.msra.mxu0 %v420
    %483 = vmatprep.mubr.bf16.mxu0 %v443
    %484 = vmatmul.mubr.bf16.gmra.mxu0 %v144
    %v485 = vpop.f32.mrf.mxu0
    %v486 = vadd.f32 %v339, %v485
    %v487 = vpop.f32.mrf.mxu0
    %v488 = vadd.f32 %v341, %v487
    %v489 = vpop.f32.mrf.mxu0
    %v490 = vadd.f32 %v343, %v489
    %v491 = vpop.f32.mrf.mxu0
    %v492 = vadd.f32 %v345, %v491
    %493 = vdwg.mxu0
    %v494 = vlaneseq
    %v495 = vshrl.u32 %v494, 7
    %v496 = vsub.s32 4, %v495
    %v497 = vrot.slane %v157, %v496
    %v498 = vlaneseq
    %v499 = vshrl.u32 %v498, 7
    %v500 = vsub.s32 4, %v499
    %v501 = vrot.slane %v158, %v500
    %v502 = vadd.f32 %v486, %v497
    %v503 = vadd.f32 %v488, %v501
    %v504 = vadd.f32 %v490, %v497
    %v505 = vadd.f32 %v492, %v501
    %v506 = vmax.f32 %v502, 0.0
    %v507 = vmax.f32 %v503, 0.0
    %v508 = vmax.f32 %v504, 0.0
    %v509 = vmax.f32 %v505, 0.0
    %v510 = vpack.c.bf16 %v508, %v506
    %v511 = vpack.c.bf16 %v509, %v507
    %s512 = scalar_lea.vmem [#allocation5], 304
    %v513 = vld [vmem:[%s512] sm:$0xff]
    %v514 = vld [vmem:[%s512 + $0x8] sm:$0xff]
    %v515 = vld [vmem:[%s512 + $0x10] sm:$0xff]
    %v516 = vld [vmem:[%s512 + $0x18] sm:$0xff]
    %v517 = vld [vmem:[%s512 + $0x20] sm:$0xff]
    %v518 = vld [vmem:[%s512 + $0x28] sm:$0xff]
    %v519 = vld [vmem:[%s512 + $0x30] sm:$0xff]
    %v520 = vld [vmem:[%s512 + $0x38] sm:$0xff]
    %v521 = vld [vmem:[%s512 + $0x40] sm:$0xff]
    %v522 = vld [vmem:[%s512 + $0x48] sm:$0xff]
    %v523 = vld [vmem:[%s512 + $0x50] sm:$0xff]
    %v524 = vld [vmem:[%s512 + $0x58] sm:$0xff]
    %v525 = vld [vmem:[%s512 + $0x60] sm:$0xff]
    %v526 = vld [vmem:[%s512 + $0x68] sm:$0xff]
    %v527 = vld [vmem:[%s512 + $0x70] sm:$0xff]
    %v528 = vld [vmem:[%s512 + $0x78] sm:$0xff]
    %v529 = vld [vmem:[%s512 + $0x80] sm:$0xff]
    %v530 = vld [vmem:[%s512 + $0x88] sm:$0xff]
    %v531 = vld [vmem:[%s512 + $0x90] sm:$0x77]
    %v532 = vlaneseq
    %v533 = vshrl.u32 %v532, 7
    %v534 = vsub.s32 1, %v533
    %v535 = vrot.slane %v60, %v534
    %v536 = vlaneseq
    %v537 = vshrl.u32 %v536, 7
    %v538 = vsub.s32 1, %v537
    %v539 = vrot.slane %v61, %v538
    %v559 = vunpack.c.l.b16 %v513
    %v560 = vunpack.c.h.b16 %v513
    %v561 = vunpack.c.l.b16 %v514
    %v562 = vunpack.c.h.b16 %v514
    %v563 = vunpack.c.l.b16 %v515
    %v564 = vunpack.c.h.b16 %v515
    %v565 = vunpack.c.l.b16 %v516
    %v566 = vunpack.c.h.b16 %v516
    %v567 = vunpack.c.l.b16 %v517
    %v568 = vunpack.c.h.b16 %v517
    %v569 = vunpack.c.l.b16 %v518
    %v570 = vunpack.c.h.b16 %v518
    %v571 = vunpack.c.l.b16 %v519
    %v572 = vunpack.c.h.b16 %v519
    %v573 = vunpack.c.l.b16 %v520
    %v574 = vunpack.c.h.b16 %v520
    %v575 = vunpack.c.l.b16 %v521
    %v576 = vunpack.c.h.b16 %v521
    %v577 = vunpack.c.l.b16 %v522
    %v578 = vunpack.c.h.b16 %v522
    %v579 = vunpack.c.l.b16 %v523
    %v580 = vunpack.c.h.b16 %v523
    %v581 = vunpack.c.l.b16 %v524
    %v582 = vunpack.c.h.b16 %v524
    %v583 = vunpack.c.l.b16 %v525
    %v584 = vunpack.c.h.b16 %v525
    %v585 = vunpack.c.l.b16 %v526
    %v586 = vunpack.c.h.b16 %v526
    %v587 = vunpack.c.l.b16 %v527
    %v588 = vunpack.c.h.b16 %v527
    %v589 = vunpack.c.l.b16 %v528
    %v590 = vunpack.c.h.b16 %v528
    %v591 = vunpack.c.l.b16 %v529
    %v592 = vunpack.c.h.b16 %v529
    %v593 = vunpack.c.l.b16 %v530
    %v594 = vunpack.c.h.b16 %v530
    %v595 = vunpack.c.l.b16 %v531
    %v596 = vunpack.c.h.b16 %v531
    %v597 = vpack.c.b16 %v561, %v559
    %v598 = vpack.c.b16 %v562, %v560
    %v599 = vpack.c.b16 %v565, %v563
    %v600 = vpack.c.b16 %v566, %v564
    %v601 = vpack.c.b16 %v569, %v567
    %v602 = vpack.c.b16 %v570, %v568
    %v603 = vpack.c.b16 %v573, %v571
    %v604 = vpack.c.b16 %v574, %v572
    %v605 = vpack.c.b16 %v577, %v575
    %v606 = vpack.c.b16 %v578, %v576
    %v607 = vpack.c.b16 %v581, %v579
    %v608 = vpack.c.b16 %v582, %v580
    %v609 = vpack.c.b16 %v585, %v583
    %v610 = vpack.c.b16 %v586, %v584
    %v611 = vpack.c.b16 %v589, %v587
    %v612 = vpack.c.b16 %v590, %v588
    %v613 = vpack.c.b16 %v593, %v591
    %v614 = vpack.c.b16 %v594, %v592
    %v615 = vpack.c.b16 %v595, %v595
    %v616 = vpack.c.b16 %v596, %v596
    %v636 = vsel %vm293, %v511, 0
    %v639 = vsel %vm297, %v615, 0
    %v642 = vsel %vm297, %v616, 0
    %644 = vmatprep.subr.bf16.mxu0 %v612
    %645 = vmatpush1.bf16.msra.mxu0 %v611
    %646 = vmatprep.subr.bf16.mxu0 %v610
    %647 = vmatpush1.bf16.msra.mxu0 %v609
    %648 = vmatprep.subr.bf16.mxu0 %v608
    %649 = vmatpush1.bf16.msra.mxu0 %v607
    %650 = vmatprep.subr.bf16.mxu0 %v606
    %651 = vmatpush1.bf16.msra.mxu0 %v605
    %652 = vmatprep.subr.bf16.mxu0 %v604
    %653 = vmatpush1.bf16.msra.mxu0 %v603
    %654 = vmatprep.subr.bf16.mxu0 %v602
    %655 = vmatpush1.bf16.msra.mxu0 %v601
    %656 = vmatprep.subr.bf16.mxu0 %v600
    %657 = vmatpush1.bf16.msra.mxu0 %v599
    %658 = vmatprep.subr.bf16.mxu0 %v598
    %659 = vmatpush1.bf16.msra.mxu0 %v597
    %660 = vmatprep.subr.bf16.mxu0 0
    %661 = vmatpush2.bf16.msra.mxu0 0
    %662 = vmatprep.subr.bf16.mxu0 0
    %663 = vmatpush2.bf16.msra.mxu0 0
    %664 = vmatprep.subr.bf16.mxu0 0
    %665 = vmatpush2.bf16.msra.mxu0 0
    %666 = vmatprep.subr.bf16.mxu0 0
    %667 = vmatpush2.bf16.msra.mxu0 0
    %668 = vmatprep.subr.bf16.mxu0 0
    %669 = vmatpush2.bf16.msra.mxu0 0
    %670 = vmatprep.subr.bf16.mxu0 0
    %671 = vmatpush2.bf16.msra.mxu0 0
    %672 = vmatprep.subr.bf16.mxu0 %v642
    %673 = vmatpush2.bf16.msra.mxu0 %v639
    %674 = vmatprep.subr.bf16.mxu0 %v614
    %675 = vmatpush2.bf16.msra.mxu0 %v613
    %676 = vmatprep.mubr.bf16.mxu0 %v636
    %677 = vmatmul.mubr.bf16.gmra.mxu0 %v510
    %v678 = vpop.f32.mrf.mxu0
    %v679 = vadd.f32 %v535, %v678
    %v680 = vpop.f32.mrf.mxu0
    %v681 = vadd.f32 %v539, %v680
    %v682 = vpop.f32.mrf.mxu0
    %v683 = vadd.f32 %v535, %v682
    %v684 = vpop.f32.mrf.mxu0
    %v685 = vadd.f32 %v539, %v684
    %686 = vdwg.mxu0
    %v687 = vmax.f32 %v679, 0.0
    %v688 = vmax.f32 %v681, 0.0
    %v689 = vmax.f32 %v683, 0.0
    %v690 = vmax.f32 %v685, 0.0
    %v691 = vpack.c.bf16 %v689, %v687
    %v692 = vpack.c.bf16 %v690, %v688
    %s693 = scalar_lea.vmem [#allocation5], 456
    %v694 = vld [vmem:[%s693] sm:$0xff]
    %v695 = vld [vmem:[%s693 + $0x8] sm:$0xff]
    %v696 = vld [vmem:[%s693 + $0x10] sm:$0xff]
    %v697 = vld [vmem:[%s693 + $0x18] sm:$0xff]
    %v698 = vld [vmem:[%s693 + $0x20] sm:$0xff]
    %v699 = vld [vmem:[%s693 + $0x28] sm:$0xff]
    %v700 = vld [vmem:[%s693 + $0x30] sm:$0xff]
    %v701 = vld [vmem:[%s693 + $0x38] sm:$0xff]
    %v702 = vld [vmem:[%s693 + $0x40] sm:$0xff]
    %v703 = vld [vmem:[%s693 + $0x48] sm:$0xff]
    %v704 = vld [vmem:[%s693 + $0x50] sm:$0xff]
    %v705 = vld [vmem:[%s693 + $0x58] sm:$0xff]
    %v706 = vld [vmem:[%s693 + $0x60] sm:$0xff]
    %v707 = vld [vmem:[%s693 + $0x68] sm:$0xff]
    %v708 = vld [vmem:[%s693 + $0x70] sm:$0xff]
    %v709 = vld [vmem:[%s693 + $0x78] sm:$0xff]
    %v710 = vld [vmem:[%s693 + $0x80] sm:$0xff]
    %v711 = vld [vmem:[%s693 + $0x88] sm:$0xff]
    %v712 = vld [vmem:[%s693 + $0x90] sm:$0x77]
    %v713 = vlaneseq
    %v714 = vshrl.u32 %v713, 7
    %v715 = vsub.s32 2, %v714
    %v716 = vrot.slane %v60, %v715
    %v717 = vlaneseq
    %v718 = vshrl.u32 %v717, 7
    %v719 = vsub.s32 2, %v718
    %v720 = vrot.slane %v61, %v719
    %v740 = vunpack.c.l.b16 %v694
    %v741 = vunpack.c.h.b16 %v694
    %v742 = vunpack.c.l.b16 %v695
    %v743 = vunpack.c.h.b16 %v695
    %v744 = vunpack.c.l.b16 %v696
    %v745 = vunpack.c.h.b16 %v696
    %v746 = vunpack.c.l.b16 %v697
    %v747 = vunpack.c.h.b16 %v697
    %v748 = vunpack.c.l.b16 %v698
    %v749 = vunpack.c.h.b16 %v698
    %v750 = vunpack.c.l.b16 %v699
    %v751 = vunpack.c.h.b16 %v699
    %v752 = vunpack.c.l.b16 %v700
    %v753 = vunpack.c.h.b16 %v700
    %v754 = vunpack.c.l.b16 %v701
    %v755 = vunpack.c.h.b16 %v701
    %v756 = vunpack.c.l.b16 %v702
    %v757 = vunpack.c.h.b16 %v702
    %v758 = vunpack.c.l.b16 %v703
    %v759 = vunpack.c.h.b16 %v703
    %v760 = vunpack.c.l.b16 %v704
    %v761 = vunpack.c.h.b16 %v704
    %v762 = vunpack.c.l.b16 %v705
    %v763 = vunpack.c.h.b16 %v705
    %v764 = vunpack.c.l.b16 %v706
    %v765 = vunpack.c.h.b16 %v706
    %v766 = vunpack.c.l.b16 %v707
    %v767 = vunpack.c.h.b16 %v707
    %v768 = vunpack.c.l.b16 %v708
    %v769 = vunpack.c.h.b16 %v708
    %v770 = vunpack.c.l.b16 %v709
    %v771 = vunpack.c.h.b16 %v709
    %v772 = vunpack.c.l.b16 %v710
    %v773 = vunpack.c.h.b16 %v710
    %v774 = vunpack.c.l.b16 %v711
    %v775 = vunpack.c.h.b16 %v711
    %v776 = vunpack.c.l.b16 %v712
    %v777 = vunpack.c.h.b16 %v712
    %v778 = vpack.c.b16 %v742, %v740
    %v779 = vpack.c.b16 %v743, %v741
    %v780 = vpack.c.b16 %v746, %v744
    %v781 = vpack.c.b16 %v747, %v745
    %v782 = vpack.c.b16 %v750, %v748
    %v783 = vpack.c.b16 %v751, %v749
    %v784 = vpack.c.b16 %v754, %v752
    %v785 = vpack.c.b16 %v755, %v753
    %v786 = vpack.c.b16 %v758, %v756
    %v787 = vpack.c.b16 %v759, %v757
    %v788 = vpack.c.b16 %v762, %v760
    %v789 = vpack.c.b16 %v763, %v761
    %v790 = vpack.c.b16 %v766, %v764
    %v791 = vpack.c.b16 %v767, %v765
    %v792 = vpack.c.b16 %v770, %v768
    %v793 = vpack.c.b16 %v771, %v769
    %v794 = vpack.c.b16 %v774, %v772
    %v795 = vpack.c.b16 %v775, %v773
    %v796 = vpack.c.b16 %v776, %v776
    %v797 = vpack.c.b16 %v777, %v777
    %v817 = vsel %vm293, %v692, 0
    %v820 = vsel %vm297, %v796, 0
    %v823 = vsel %vm297, %v797, 0
    %825 = vmatprep.subr.bf16.mxu0 %v793
    %826 = vmatpush1.bf16.msra.mxu0 %v792
    %827 = vmatprep.subr.bf16.mxu0 %v791
    %828 = vmatpush1.bf16.msra.mxu0 %v790
    %829 = vmatprep.subr.bf16.mxu0 %v789
    %830 = vmatpush1.bf16.msra.mxu0 %v788
    %831 = vmatprep.subr.bf16.mxu0 %v787
    %832 = vmatpush1.bf16.msra.mxu0 %v786
    %833 = vmatprep.subr.bf16.mxu0 %v785
    %834 = vmatpush1.bf16.msra.mxu0 %v784
    %835 = vmatprep.subr.bf16.mxu0 %v783
    %836 = vmatpush1.bf16.msra.mxu0 %v782
    %837 = vmatprep.subr.bf16.mxu0 %v781
    %838 = vmatpush1.bf16.msra.mxu0 %v780
    %839 = vmatprep.subr.bf16.mxu0 %v779
    %840 = vmatpush1.bf16.msra.mxu0 %v778
    %841 = vmatprep.subr.bf16.mxu0 0
    %842 = vmatpush2.bf16.msra.mxu0 0
    %843 = vmatprep.subr.bf16.mxu0 0
    %844 = vmatpush2.bf16.msra.mxu0 0
    %845 = vmatprep.subr.bf16.mxu0 0
    %846 = vmatpush2.bf16.msra.mxu0 0
    %847 = vmatprep.subr.bf16.mxu0 0
    %848 = vmatpush2.bf16.msra.mxu0 0
    %849 = vmatprep.subr.bf16.mxu0 0
    %850 = vmatpush2.bf16.msra.mxu0 0
    %851 = vmatprep.subr.bf16.mxu0 0
    %852 = vmatpush2.bf16.msra.mxu0 0
    %853 = vmatprep.subr.bf16.mxu0 %v823
    %854 = vmatpush2.bf16.msra.mxu0 %v820
    %855 = vmatprep.subr.bf16.mxu0 %v795
    %856 = vmatpush2.bf16.msra.mxu0 %v794
    %857 = vmatprep.mubr.bf16.mxu0 %v817
    %858 = vmatmul.mubr.bf16.gmra.mxu0 %v691
    %v859 = vpop.f32.mrf.mxu0
    %v860 = vadd.f32 %v716, %v859
    %v861 = vpop.f32.mrf.mxu0
    %v862 = vadd.f32 %v720, %v861
    %v863 = vpop.f32.mrf.mxu0
    %v864 = vadd.f32 %v716, %v863
    %v865 = vpop.f32.mrf.mxu0
    %v866 = vadd.f32 %v720, %v865
    %867 = vdwg.mxu0
    %v868 = vmax.f32 %v860, 0.0
    %v869 = vmax.f32 %v862, 0.0
    %v870 = vmax.f32 %v864, 0.0
    %v871 = vmax.f32 %v866, 0.0
    %v872 = vpack.c.bf16 %v870, %v868
    %v873 = vpack.c.bf16 %v871, %v869
    %s874 = scalar_lea.vmem [#allocation5], 608
    %v875 = vld [vmem:[%s874] sm:$0xff]
    %v876 = vld [vmem:[%s874 + $0x8] sm:$0xff]
    %v877 = vld [vmem:[%s874 + $0x10] sm:$0xff]
    %v878 = vld [vmem:[%s874 + $0x18] sm:$0xff]
    %v879 = vld [vmem:[%s874 + $0x20] sm:$0xff]
    %v880 = vld [vmem:[%s874 + $0x28] sm:$0xff]
    %v881 = vld [vmem:[%s874 + $0x30] sm:$0xff]
    %v882 = vld [vmem:[%s874 + $0x38] sm:$0xff]
    %v883 = vld [vmem:[%s874 + $0x40] sm:$0xff]
    %v884 = vld [vmem:[%s874 + $0x48] sm:$0xff]
    %v885 = vld [vmem:[%s874 + $0x50] sm:$0xff]
    %v886 = vld [vmem:[%s874 + $0x58] sm:$0xff]
    %v887 = vld [vmem:[%s874 + $0x60] sm:$0xff]
    %v888 = vld [vmem:[%s874 + $0x68] sm:$0xff]
    %v889 = vld [vmem:[%s874 + $0x70] sm:$0xff]
    %v890 = vld [vmem:[%s874 + $0x78] sm:$0xff]
    %v891 = vld [vmem:[%s874 + $0x80] sm:$0xff]
    %v892 = vld [vmem:[%s874 + $0x88] sm:$0xff]
    %v893 = vld [vmem:[%s874 + $0x90] sm:$0x77]
    %v894 = vlaneseq
    %v895 = vshrl.u32 %v894, 7
    %v896 = vsub.s32 3, %v895
    %v897 = vrot.slane %v60, %v896
    %v898 = vlaneseq
    %v899 = vshrl.u32 %v898, 7
    %v900 = vsub.s32 3, %v899
    %v901 = vrot.slane %v61, %v900
    %v921 = vunpack.c.l.b16 %v875
    %v922 = vunpack.c.h.b16 %v875
    %v923 = vunpack.c.l.b16 %v876
    %v924 = vunpack.c.h.b16 %v876
    %v925 = vunpack.c.l.b16 %v877
    %v926 = vunpack.c.h.b16 %v877
    %v927 = vunpack.c.l.b16 %v878
    %v928 = vunpack.c.h.b16 %v878
    %v929 = vunpack.c.l.b16 %v879
    %v930 = vunpack.c.h.b16 %v879
    %v931 = vunpack.c.l.b16 %v880
    %v932 = vunpack.c.h.b16 %v880
    %v933 = vunpack.c.l.b16 %v881
    %v934 = vunpack.c.h.b16 %v881
    %v935 = vunpack.c.l.b16 %v882
    %v936 = vunpack.c.h.b16 %v882
    %v937 = vunpack.c.l.b16 %v883
    %v938 = vunpack.c.h.b16 %v883
    %v939 = vunpack.c.l.b16 %v884
    %v940 = vunpack.c.h.b16 %v884
    %v941 = vunpack.c.l.b16 %v885
    %v942 = vunpack.c.h.b16 %v885
    %v943 = vunpack.c.l.b16 %v886
    %v944 = vunpack.c.h.b16 %v886
    %v945 = vunpack.c.l.b16 %v887
    %v946 = vunpack.c.h.b16 %v887
    %v947 = vunpack.c.l.b16 %v888
    %v948 = vunpack.c.h.b16 %v888
    %v949 = vunpack.c.l.b16 %v889
    %v950 = vunpack.c.h.b16 %v889
    %v951 = vunpack.c.l.b16 %v890
    %v952 = vunpack.c.h.b16 %v890
    %v953 = vunpack.c.l.b16 %v891
    %v954 = vunpack.c.h.b16 %v891
    %v955 = vunpack.c.l.b16 %v892
    %v956 = vunpack.c.h.b16 %v892
    %v957 = vunpack.c.l.b16 %v893
    %v958 = vunpack.c.h.b16 %v893
    %v959 = vpack.c.b16 %v923, %v921
    %v960 = vpack.c.b16 %v924, %v922
    %v961 = vpack.c.b16 %v927, %v925
    %v962 = vpack.c.b16 %v928, %v926
    %v963 = vpack.c.b16 %v931, %v929
    %v964 = vpack.c.b16 %v932, %v930
    %v965 = vpack.c.b16 %v935, %v933
    %v966 = vpack.c.b16 %v936, %v934
    %v967 = vpack.c.b16 %v939, %v937
    %v968 = vpack.c.b16 %v940, %v938
    %v969 = vpack.c.b16 %v943, %v941
    %v970 = vpack.c.b16 %v944, %v942
    %v971 = vpack.c.b16 %v947, %v945
    %v972 = vpack.c.b16 %v948, %v946
    %v973 = vpack.c.b16 %v951, %v949
    %v974 = vpack.c.b16 %v952, %v950
    %v975 = vpack.c.b16 %v955, %v953
    %v976 = vpack.c.b16 %v956, %v954
    %v977 = vpack.c.b16 %v957, %v957
    %v978 = vpack.c.b16 %v958, %v958
    %v998 = vsel %vm293, %v873, 0
    %v1001 = vsel %vm297, %v977, 0
    %v1004 = vsel %vm297, %v978, 0
    %1006 = vmatprep.subr.bf16.mxu0 %v974
    %1007 = vmatpush1.bf16.msra.mxu0 %v973
    %1008 = vmatprep.subr.bf16.mxu0 %v972
    %1009 = vmatpush1.bf16.msra.mxu0 %v971
    %1010 = vmatprep.subr.bf16.mxu0 %v970
    %1011 = vmatpush1.bf16.msra.mxu0 %v969
    %1012 = vmatprep.subr.bf16.mxu0 %v968
    %1013 = vmatpush1.bf16.msra.mxu0 %v967
    %1014 = vmatprep.subr.bf16.mxu0 %v966
    %1015 = vmatpush1.bf16.msra.mxu0 %v965
    %1016 = vmatprep.subr.bf16.mxu0 %v964
    %1017 = vmatpush1.bf16.msra.mxu0 %v963
    %1018 = vmatprep.subr.bf16.mxu0 %v962
    %1019 = vmatpush1.bf16.msra.mxu0 %v961
    %1020 = vmatprep.subr.bf16.mxu0 %v960
    %1021 = vmatpush1.bf16.msra.mxu0 %v959
    %1022 = vmatprep.subr.bf16.mxu0 0
    %1023 = vmatpush2.bf16.msra.mxu0 0
    %1024 = vmatprep.subr.bf16.mxu0 0
    %1025 = vmatpush2.bf16.msra.mxu0 0
    %1026 = vmatprep.subr.bf16.mxu0 0
    %1027 = vmatpush2.bf16.msra.mxu0 0
    %1028 = vmatprep.subr.bf16.mxu0 0
    %1029 = vmatpush2.bf16.msra.mxu0 0
    %1030 = vmatprep.subr.bf16.mxu0 0
    %1031 = vmatpush2.bf16.msra.mxu0 0
    %1032 = vmatprep.subr.bf16.mxu0 0
    %1033 = vmatpush2.bf16.msra.mxu0 0
    %1034 = vmatprep.subr.bf16.mxu0 %v1004
    %1035 = vmatpush2.bf16.msra.mxu0 %v1001
    %1036 = vmatprep.subr.bf16.mxu0 %v976
    %1037 = vmatpush2.bf16.msra.mxu0 %v975
    %1038 = vmatprep.mubr.bf16.mxu0 %v998
    %1039 = vmatmul.mubr.bf16.gmra.mxu0 %v872
    %v1040 = vpop.f32.mrf.mxu0
    %v1041 = vadd.f32 %v897, %v1040
    %v1042 = vpop.f32.mrf.mxu0
    %v1043 = vadd.f32 %v901, %v1042
    %v1044 = vpop.f32.mrf.mxu0
    %v1045 = vadd.f32 %v897, %v1044
    %v1046 = vpop.f32.mrf.mxu0
    %v1047 = vadd.f32 %v901, %v1046
    %1048 = vdwg.mxu0
    %v1049 = vmax.f32 %v1041, 0.0
    %v1050 = vmax.f32 %v1043, 0.0
    %v1051 = vmax.f32 %v1045, 0.0
    %v1052 = vmax.f32 %v1047, 0.0
    %v1053 = vpack.c.bf16 %v1051, %v1049
    %v1054 = vpack.c.bf16 %v1052, %v1050
    %s1055 = scalar_lea.vmem [#allocation5], 760
    %v1056 = vld [vmem:[%s1055] sm:$0xff]
    %v1057 = vld [vmem:[%s1055 + $0x8] sm:$0xff]
    %v1058 = vld [vmem:[%s1055 + $0x10] sm:$0xff]
    %v1059 = vld [vmem:[%s1055 + $0x18] sm:$0xff]
    %v1060 = vld [vmem:[%s1055 + $0x20] sm:$0xff]
    %v1061 = vld [vmem:[%s1055 + $0x28] sm:$0xff]
    %v1062 = vld [vmem:[%s1055 + $0x30] sm:$0xff]
    %v1063 = vld [vmem:[%s1055 + $0x38] sm:$0xff]
    %v1064 = vld [vmem:[%s1055 + $0x40] sm:$0xff]
    %v1065 = vld [vmem:[%s1055 + $0x48] sm:$0xff]
    %v1066 = vld [vmem:[%s1055 + $0x50] sm:$0xff]
    %v1067 = vld [vmem:[%s1055 + $0x58] sm:$0xff]
    %v1068 = vld [vmem:[%s1055 + $0x60] sm:$0xff]
    %v1069 = vld [vmem:[%s1055 + $0x68] sm:$0xff]
    %v1070 = vld [vmem:[%s1055 + $0x70] sm:$0xff]
    %v1071 = vld [vmem:[%s1055 + $0x78] sm:$0xff]
    %v1072 = vld [vmem:[%s1055 + $0x80] sm:$0xff]
    %v1073 = vld [vmem:[%s1055 + $0x88] sm:$0xff]
    %v1074 = vld [vmem:[%s1055 + $0x90] sm:$0x77]
    %v1075 = vlaneseq
    %v1076 = vshrl.u32 %v1075, 7
    %v1077 = vsub.s32 5, %v1076
    %v1078 = vrot.slane %v60, %v1077
    %v1079 = vlaneseq
    %v1080 = vshrl.u32 %v1079, 7
    %v1081 = vsub.s32 5, %v1080
    %v1082 = vrot.slane %v61, %v1081
    %v1102 = vunpack.c.l.b16 %v1056
    %v1103 = vunpack.c.h.b16 %v1056
    %v1104 = vunpack.c.l.b16 %v1057
    %v1105 = vunpack.c.h.b16 %v1057
    %v1106 = vunpack.c.l.b16 %v1058
    %v1107 = vunpack.c.h.b16 %v1058
    %v1108 = vunpack.c.l.b16 %v1059
    %v1109 = vunpack.c.h.b16 %v1059
    %v1110 = vunpack.c.l.b16 %v1060
    %v1111 = vunpack.c.h.b16 %v1060
    %v1112 = vunpack.c.l.b16 %v1061
    %v1113 = vunpack.c.h.b16 %v1061
    %v1114 = vunpack.c.l.b16 %v1062
    %v1115 = vunpack.c.h.b16 %v1062
    %v1116 = vunpack.c.l.b16 %v1063
    %v1117 = vunpack.c.h.b16 %v1063
    %v1118 = vunpack.c.l.b16 %v1064
    %v1119 = vunpack.c.h.b16 %v1064
    %v1120 = vunpack.c.l.b16 %v1065
    %v1121 = vunpack.c.h.b16 %v1065
    %v1122 = vunpack.c.l.b16 %v1066
    %v1123 = vunpack.c.h.b16 %v1066
    %v1124 = vunpack.c.l.b16 %v1067
    %v1125 = vunpack.c.h.b16 %v1067
    %v1126 = vunpack.c.l.b16 %v1068
    %v1127 = vunpack.c.h.b16 %v1068
    %v1128 = vunpack.c.l.b16 %v1069
    %v1129 = vunpack.c.h.b16 %v1069
    %v1130 = vunpack.c.l.b16 %v1070
    %v1131 = vunpack.c.h.b16 %v1070
    %v1132 = vunpack.c.l.b16 %v1071
    %v1133 = vunpack.c.h.b16 %v1071
    %v1134 = vunpack.c.l.b16 %v1072
    %v1135 = vunpack.c.h.b16 %v1072
    %v1136 = vunpack.c.l.b16 %v1073
    %v1137 = vunpack.c.h.b16 %v1073
    %v1138 = vunpack.c.l.b16 %v1074
    %v1139 = vunpack.c.h.b16 %v1074
    %v1140 = vpack.c.b16 %v1104, %v1102
    %v1141 = vpack.c.b16 %v1105, %v1103
    %v1142 = vpack.c.b16 %v1108, %v1106
    %v1143 = vpack.c.b16 %v1109, %v1107
    %v1144 = vpack.c.b16 %v1112, %v1110
    %v1145 = vpack.c.b16 %v1113, %v1111
    %v1146 = vpack.c.b16 %v1116, %v1114
    %v1147 = vpack.c.b16 %v1117, %v1115
    %v1148 = vpack.c.b16 %v1120, %v1118
    %v1149 = vpack.c.b16 %v1121, %v1119
    %v1150 = vpack.c.b16 %v1124, %v1122
    %v1151 = vpack.c.b16 %v1125, %v1123
    %v1152 = vpack.c.b16 %v1128, %v1126
    %v1153 = vpack.c.b16 %v1129, %v1127
    %v1154 = vpack.c.b16 %v1132, %v1130
    %v1155 = vpack.c.b16 %v1133, %v1131
    %v1156 = vpack.c.b16 %v1136, %v1134
    %v1157 = vpack.c.b16 %v1137, %v1135
    %v1158 = vpack.c.b16 %v1138, %v1138
    %v1159 = vpack.c.b16 %v1139, %v1139
    %v1179 = vsel %vm293, %v1054, 0
    %v1182 = vsel %vm297, %v1158, 0
    %v1185 = vsel %vm297, %v1159, 0
    %1187 = vmatprep.subr.bf16.mxu0 %v1155
    %1188 = vmatpush1.bf16.msra.mxu0 %v1154
    %1189 = vmatprep.subr.bf16.mxu0 %v1153
    %1190 = vmatpush1.bf16.msra.mxu0 %v1152
    %1191 = vmatprep.subr.bf16.mxu0 %v1151
    %1192 = vmatpush1.bf16.msra.mxu0 %v1150
    %1193 = vmatprep.subr.bf16.mxu0 %v1149
    %1194 = vmatpush1.bf16.msra.mxu0 %v1148
    %1195 = vmatprep.subr.bf16.mxu0 %v1147
    %1196 = vmatpush1.bf16.msra.mxu0 %v1146
    %1197 = vmatprep.subr.bf16.mxu0 %v1145
    %1198 = vmatpush1.bf16.msra.mxu0 %v1144
    %1199 = vmatprep.subr.bf16.mxu0 %v1143
    %1200 = vmatpush1.bf16.msra.mxu0 %v1142
    %1201 = vmatprep.subr.bf16.mxu0 %v1141
    %1202 = vmatpush1.bf16.msra.mxu0 %v1140
    %1203 = vmatprep.subr.bf16.mxu0 0
    %1204 = vmatpush2.bf16.msra.mxu0 0
    %1205 = vmatprep.subr.bf16.mxu0 0
    %1206 = vmatpush2.bf16.msra.mxu0 0
    %1207 = vmatprep.subr.bf16.mxu0 0
    %1208 = vmatpush2.bf16.msra.mxu0 0
    %1209 = vmatprep.subr.bf16.mxu0 0
    %1210 = vmatpush2.bf16.msra.mxu0 0
    %1211 = vmatprep.subr.bf16.mxu0 0
    %1212 = vmatpush2.bf16.msra.mxu0 0
    %1213 = vmatprep.subr.bf16.mxu0 0
    %1214 = vmatpush2.bf16.msra.mxu0 0
    %1215 = vmatprep.subr.bf16.mxu0 %v1185
    %1216 = vmatpush2.bf16.msra.mxu0 %v1182
    %1217 = vmatprep.subr.bf16.mxu0 %v1157
    %1218 = vmatpush2.bf16.msra.mxu0 %v1156
    %1219 = vmatprep.mubr.bf16.mxu0 %v1179
    %1220 = vmatmul.mubr.bf16.gmra.mxu0 %v1053
    %v1221 = vpop.f32.mrf.mxu0
    %v1222 = vadd.f32 %v1078, %v1221
    %v1223 = vpop.f32.mrf.mxu0
    %v1224 = vadd.f32 %v1082, %v1223
    %v1225 = vpop.f32.mrf.mxu0
    %v1226 = vadd.f32 %v1078, %v1225
    %v1227 = vpop.f32.mrf.mxu0
    %v1228 = vadd.f32 %v1082, %v1227
    %1229 = vdwg.mxu0
    %v1230 = vpack.c.bf16 %v1226, %v1222
    %v1231 = vpack.c.bf16 %v1228, %v1224
    %vm1232 = vcmask 130048
    %v1234 = vsel %vm1232, %v59, 0
    %1236 = vmatprep.subr.bf16.mxu0 0
    %1237 = vmatpush1.bf16.msra.mxu0 0
    %1238 = vmatprep.subr.bf16.mxu0 0
    %1239 = vmatpush1.bf16.msra.mxu0 0
    %1240 = vmatprep.subr.bf16.mxu0 0
    %1241 = vmatpush1.bf16.msra.mxu0 0
    %1242 = vmatprep.subr.bf16.mxu0 0
    %1243 = vmatpush1.bf16.msra.mxu0 0
    %1244 = vmatprep.subr.bf16.mxu0 0
    %1245 = vmatpush1.bf16.msra.mxu0 0
    %1246 = vmatprep.subr.bf16.mxu0 0
    %1247 = vmatpush1.bf16.msra.mxu0 0
    %1248 = vmatprep.subr.bf16.mxu0 0
    %1249 = vmatpush1.bf16.msra.mxu0 0
    %1250 = vmatprep.subr.bf16.mxu0 %v1231
    %1251 = vmatpush1.bf16.msra.mxu0 %v1230
    %1252 = vmatprep.subr.bf16.mxu0 0
    %1253 = vmatpush2.bf16.msra.mxu0 0
    %1254 = vmatprep.subr.bf16.mxu0 0
    %1255 = vmatpush2.bf16.msra.mxu0 0
    %1256 = vmatprep.subr.bf16.mxu0 0
    %1257 = vmatpush2.bf16.msra.mxu0 0
    %1258 = vmatprep.subr.bf16.mxu0 0
    %1259 = vmatpush2.bf16.msra.mxu0 0
    %1260 = vmatprep.subr.bf16.mxu0 0
    %1261 = vmatpush2.bf16.msra.mxu0 0
    %1262 = vmatprep.subr.bf16.mxu0 0
    %1263 = vmatpush2.bf16.msra.mxu0 0
    %1264 = vmatprep.subr.bf16.mxu0 0
    %1265 = vmatpush2.bf16.msra.mxu0 0
    %1266 = vmatprep.subr.bf16.mxu0 0
    %1267 = vmatpush2.bf16.msra.mxu0 0
    %1268 = vmatprep.mubr.bf16.mxu0 0
    %1269 = vmatmul.mubr.bf16.gmra.mxu0 %v1234
    %v1270 = vpop.f32.mrf.mxu0
    %v1271 = vadd.f32 0.0, %v1270
    %v1272 = vpop.f32.mrf.mxu0
    %v1273 = vadd.f32 0.0, %v1272
    %v1274 = vpop.f32.mrf.mxu0
    %v1275 = vpop.f32.mrf.mxu0
    %1276 = vdwg.mxu0
    %v1277 = vpack.c.bf16 %v1271, %v1271
    %v1278 = vpack.c.bf16 %v1273, %v1273
    %s1279 = scalar_lea.vmem [#allocation5], 912
    %v1280 = vld [vmem:[%s1279] sm:$0xff]
    %v1281 = vld [vmem:[%s1279 + $0x8] sm:$0xff]
    %v1282 = vld [vmem:[%s1279 + $0x10] sm:$0xff]
    %v1283 = vld [vmem:[%s1279 + $0x18] sm:$0xff]
    %v1284 = vld [vmem:[%s1279 + $0x20] sm:$0xff]
    %v1285 = vld [vmem:[%s1279 + $0x28] sm:$0xff]
    %v1286 = vld [vmem:[%s1279 + $0x30] sm:$0xff]
    %v1287 = vld [vmem:[%s1279 + $0x38] sm:$0xff]
    %v1288 = vld [vmem:[%s1279 + $0x40] sm:$0xff]
    %v1289 = vld [vmem:[%s1279 + $0x48] sm:$0xff]
    %v1290 = vld [vmem:[%s1279 + $0x50] sm:$0xff]
    %v1291 = vld [vmem:[%s1279 + $0x58] sm:$0xff]
    %v1292 = vld [vmem:[%s1279 + $0x60] sm:$0xff]
    %v1293 = vld [vmem:[%s1279 + $0x68] sm:$0xff]
    %v1294 = vld [vmem:[%s1279 + $0x70] sm:$0xff]
    %v1295 = vld [vmem:[%s1279 + $0x78] sm:$0xff]
    %v1296 = vld [vmem:[%s1279 + $0x80] sm:$0xff]
    %v1297 = vld [vmem:[%s1279 + $0x88] sm:$0xff]
    %v1298 = vld [vmem:[%s1279 + $0x90] sm:$0x77]
    %v1299 = vlaneseq
    %v1300 = vshrl.u32 %v1299, 7
    %v1301 = vsub.s32 6, %v1300
    %v1302 = vrot.slane %v60, %v1301
    %v1303 = vlaneseq
    %v1304 = vshrl.u32 %v1303, 7
    %v1305 = vsub.s32 6, %v1304
    %v1306 = vrot.slane %v61, %v1305
    %v1326 = vunpack.c.l.b16 %v1280
    %v1327 = vunpack.c.h.b16 %v1280
    %v1328 = vunpack.c.l.b16 %v1281
    %v1329 = vunpack.c.h.b16 %v1281
    %v1330 = vunpack.c.l.b16 %v1282
    %v1331 = vunpack.c.h.b16 %v1282
    %v1332 = vunpack.c.l.b16 %v1283
    %v1333 = vunpack.c.h.b16 %v1283
    %v1334 = vunpack.c.l.b16 %v1284
    %v1335 = vunpack.c.h.b16 %v1284
    %v1336 = vunpack.c.l.b16 %v1285
    %v1337 = vunpack.c.h.b16 %v1285
    %v1338 = vunpack.c.l.b16 %v1286
    %v1339 = vunpack.c.h.b16 %v1286
    %v1340 = vunpack.c.l.b16 %v1287
    %v1341 = vunpack.c.h.b16 %v1287
    %v1342 = vunpack.c.l.b16 %v1288
    %v1343 = vunpack.c.h.b16 %v1288
    %v1344 = vunpack.c.l.b16 %v1289
    %v1345 = vunpack.c.h.b16 %v1289
    %v1346 = vunpack.c.l.b16 %v1290
    %v1347 = vunpack.c.h.b16 %v1290
    %v1348 = vunpack.c.l.b16 %v1291
    %v1349 = vunpack.c.h.b16 %v1291
    %v1350 = vunpack.c.l.b16 %v1292
    %v1351 = vunpack.c.h.b16 %v1292
    %v1352 = vunpack.c.l.b16 %v1293
    %v1353 = vunpack.c.h.b16 %v1293
    %v1354 = vunpack.c.l.b16 %v1294
    %v1355 = vunpack.c.h.b16 %v1294
    %v1356 = vunpack.c.l.b16 %v1295
    %v1357 = vunpack.c.h.b16 %v1295
    %v1358 = vunpack.c.l.b16 %v1296
    %v1359 = vunpack.c.h.b16 %v1296
    %v1360 = vunpack.c.l.b16 %v1297
    %v1361 = vunpack.c.h.b16 %v1297
    %v1362 = vunpack.c.l.b16 %v1298
    %v1363 = vunpack.c.h.b16 %v1298
    %v1364 = vpack.c.b16 %v1328, %v1326
    %v1365 = vpack.c.b16 %v1329, %v1327
    %v1366 = vpack.c.b16 %v1332, %v1330
    %v1367 = vpack.c.b16 %v1333, %v1331
    %v1368 = vpack.c.b16 %v1336, %v1334
    %v1369 = vpack.c.b16 %v1337, %v1335
    %v1370 = vpack.c.b16 %v1340, %v1338
    %v1371 = vpack.c.b16 %v1341, %v1339
    %v1372 = vpack.c.b16 %v1344, %v1342
    %v1373 = vpack.c.b16 %v1345, %v1343
    %v1374 = vpack.c.b16 %v1348, %v1346
    %v1375 = vpack.c.b16 %v1349, %v1347
    %v1376 = vpack.c.b16 %v1352, %v1350
    %v1377 = vpack.c.b16 %v1353, %v1351
    %v1378 = vpack.c.b16 %v1356, %v1354
    %v1379 = vpack.c.b16 %v1357, %v1355
    %v1380 = vpack.c.b16 %v1360, %v1358
    %v1381 = vpack.c.b16 %v1361, %v1359
    %v1382 = vpack.c.b16 %v1362, %v1362
    %v1383 = vpack.c.b16 %v1363, %v1363
    %v1403 = vsel %vm293, %v1278, 0
    %v1406 = vsel %vm297, %v1382, 0
    %v1409 = vsel %vm297, %v1383, 0
    %1411 = vmatprep.subr.bf16.mxu0 %v1379
    %1412 = vmatpush1.bf16.msra.mxu0 %v1378
    %1413 = vmatprep.subr.bf16.mxu0 %v1377
    %1414 = vmatpush1.bf16.msra.mxu0 %v1376
    %1415 = vmatprep.subr.bf16.mxu0 %v1375
    %1416 = vmatpush1.bf16.msra.mxu0 %v1374
    %1417 = vmatprep.subr.bf16.mxu0 %v1373
    %1418 = vmatpush1.bf16.msra.mxu0 %v1372
    %1419 = vmatprep.subr.bf16.mxu0 %v1371
    %1420 = vmatpush1.bf16.msra.mxu0 %v1370
    %1421 = vmatprep.subr.bf16.mxu0 %v1369
    %1422 = vmatpush1.bf16.msra.mxu0 %v1368
    %1423 = vmatprep.subr.bf16.mxu0 %v1367
    %1424 = vmatpush1.bf16.msra.mxu0 %v1366
    %1425 = vmatprep.subr.bf16.mxu0 %v1365
    %1426 = vmatpush1.bf16.msra.mxu0 %v1364
    %1427 = vmatprep.subr.bf16.mxu0 0
    %1428 = vmatpush2.bf16.msra.mxu0 0
    %1429 = vmatprep.subr.bf16.mxu0 0
    %1430 = vmatpush2.bf16.msra.mxu0 0
    %1431 = vmatprep.subr.bf16.mxu0 0
    %1432 = vmatpush2.bf16.msra.mxu0 0
    %1433 = vmatprep.subr.bf16.mxu0 0
    %1434 = vmatpush2.bf16.msra.mxu0 0
    %1435 = vmatprep.subr.bf16.mxu0 0
    %1436 = vmatpush2.bf16.msra.mxu0 0
    %1437 = vmatprep.subr.bf16.mxu0 0
    %1438 = vmatpush2.bf16.msra.mxu0 0
    %1439 = vmatprep.subr.bf16.mxu0 %v1409
    %1440 = vmatpush2.bf16.msra.mxu0 %v1406
    %1441 = vmatprep.subr.bf16.mxu0 %v1381
    %1442 = vmatpush2.bf16.msra.mxu0 %v1380
    %1443 = vmatprep.mubr.bf16.mxu0 %v1403
    %1444 = vmatmul.mubr.bf16.gmra.mxu0 %v1277
    %v1445 = vpop.f32.mrf.mxu0
    %v1446 = vadd.f32 %v1302, %v1445
    %v1447 = vpop.f32.mrf.mxu0
    %v1448 = vadd.f32 %v1306, %v1447
    %v1449 = vpop.f32.mrf.mxu0
    %v1450 = vpop.f32.mrf.mxu0
    %1451 = vdwg.mxu0
    %v1452 = vmax.f32 %v1446, 0.0
    %v1453 = vmax.f32 %v1448, 0.0
    %v1454 = vpack.c.bf16 %v1452, %v1452
    %v1455 = vpack.c.bf16 %v1453, %v1453
    %s1456 = scalar_lea.vmem [#allocation5], 1064
    %v1457 = vld [vmem:[%s1456] sm:$0xff]
    %v1458 = vld [vmem:[%s1456 + $0x8] sm:$0xff]
    %v1459 = vld [vmem:[%s1456 + $0x10] sm:$0xff]
    %v1460 = vld [vmem:[%s1456 + $0x18] sm:$0xff]
    %v1461 = vld [vmem:[%s1456 + $0x20] sm:$0xff]
    %v1462 = vld [vmem:[%s1456 + $0x28] sm:$0xff]
    %v1463 = vld [vmem:[%s1456 + $0x30] sm:$0xff]
    %v1464 = vld [vmem:[%s1456 + $0x38] sm:$0xff]
    %v1465 = vld [vmem:[%s1456 + $0x40] sm:$0xff]
    %v1466 = vld [vmem:[%s1456 + $0x48] sm:$0xff]
    %v1467 = vld [vmem:[%s1456 + $0x50] sm:$0xff]
    %v1468 = vld [vmem:[%s1456 + $0x58] sm:$0xff]
    %v1469 = vld [vmem:[%s1456 + $0x60] sm:$0xff]
    %v1470 = vld [vmem:[%s1456 + $0x68] sm:$0xff]
    %v1471 = vld [vmem:[%s1456 + $0x70] sm:$0xff]
    %v1472 = vld [vmem:[%s1456 + $0x78] sm:$0xff]
    %v1473 = vld [vmem:[%s1456 + $0x80] sm:$0xff]
    %v1474 = vld [vmem:[%s1456 + $0x88] sm:$0xff]
    %v1475 = vld [vmem:[%s1456 + $0x90] sm:$0x77]
    %v1476 = vlaneseq
    %v1477 = vshrl.u32 %v1476, 7
    %v1478 = vsub.s32 7, %v1477
    %v1479 = vrot.slane %v60, %v1478
    %v1480 = vlaneseq
    %v1481 = vshrl.u32 %v1480, 7
    %v1482 = vsub.s32 7, %v1481
    %v1483 = vrot.slane %v61, %v1482
    %v1503 = vunpack.c.l.b16 %v1457
    %v1504 = vunpack.c.h.b16 %v1457
    %v1505 = vunpack.c.l.b16 %v1458
    %v1506 = vunpack.c.h.b16 %v1458
    %v1507 = vunpack.c.l.b16 %v1459
    %v1508 = vunpack.c.h.b16 %v1459
    %v1509 = vunpack.c.l.b16 %v1460
    %v1510 = vunpack.c.h.b16 %v1460
    %v1511 = vunpack.c.l.b16 %v1461
    %v1512 = vunpack.c.h.b16 %v1461
    %v1513 = vunpack.c.l.b16 %v1462
    %v1514 = vunpack.c.h.b16 %v1462
    %v1515 = vunpack.c.l.b16 %v1463
    %v1516 = vunpack.c.h.b16 %v1463
    %v1517 = vunpack.c.l.b16 %v1464
    %v1518 = vunpack.c.h.b16 %v1464
    %v1519 = vunpack.c.l.b16 %v1465
    %v1520 = vunpack.c.h.b16 %v1465
    %v1521 = vunpack.c.l.b16 %v1466
    %v1522 = vunpack.c.h.b16 %v1466
    %v1523 = vunpack.c.l.b16 %v1467
    %v1524 = vunpack.c.h.b16 %v1467
    %v1525 = vunpack.c.l.b16 %v1468
    %v1526 = vunpack.c.h.b16 %v1468
    %v1527 = vunpack.c.l.b16 %v1469
    %v1528 = vunpack.c.h.b16 %v1469
    %v1529 = vunpack.c.l.b16 %v1470
    %v1530 = vunpack.c.h.b16 %v1470
    %v1531 = vunpack.c.l.b16 %v1471
    %v1532 = vunpack.c.h.b16 %v1471
    %v1533 = vunpack.c.l.b16 %v1472
    %v1534 = vunpack.c.h.b16 %v1472
    %v1535 = vunpack.c.l.b16 %v1473
    %v1536 = vunpack.c.h.b16 %v1473
    %v1537 = vunpack.c.l.b16 %v1474
    %v1538 = vunpack.c.h.b16 %v1474
    %v1539 = vunpack.c.l.b16 %v1475
    %v1540 = vunpack.c.h.b16 %v1475
    %v1541 = vpack.c.b16 %v1505, %v1503
    %v1542 = vpack.c.b16 %v1506, %v1504
    %v1543 = vpack.c.b16 %v1509, %v1507
    %v1544 = vpack.c.b16 %v1510, %v1508
    %v1545 = vpack.c.b16 %v1513, %v1511
    %v1546 = vpack.c.b16 %v1514, %v1512
    %v1547 = vpack.c.b16 %v1517, %v1515
    %v1548 = vpack.c.b16 %v1518, %v1516
    %v1549 = vpack.c.b16 %v1521, %v1519
    %v1550 = vpack.c.b16 %v1522, %v1520
    %v1551 = vpack.c.b16 %v1525, %v1523
    %v1552 = vpack.c.b16 %v1526, %v1524
    %v1553 = vpack.c.b16 %v1529, %v1527
    %v1554 = vpack.c.b16 %v1530, %v1528
    %v1555 = vpack.c.b16 %v1533, %v1531
    %v1556 = vpack.c.b16 %v1534, %v1532
    %v1557 = vpack.c.b16 %v1537, %v1535
    %v1558 = vpack.c.b16 %v1538, %v1536
    %v1559 = vpack.c.b16 %v1539, %v1539
    %v1560 = vpack.c.b16 %v1540, %v1540
    %v1580 = vsel %vm293, %v1455, 0
    %v1583 = vsel %vm297, %v1559, 0
    %v1586 = vsel %vm297, %v1560, 0
    %1588 = vmatprep.subr.bf16.mxu0 %v1556
    %1589 = vmatpush1.bf16.msra.mxu0 %v1555
    %1590 = vmatprep.subr.bf16.mxu0 %v1554
    %1591 = vmatpush1.bf16.msra.mxu0 %v1553
    %1592 = vmatprep.subr.bf16.mxu0 %v1552
    %1593 = vmatpush1.bf16.msra.mxu0 %v1551
    %1594 = vmatprep.subr.bf16.mxu0 %v1550
    %1595 = vmatpush1.bf16.msra.mxu0 %v1549
    %1596 = vmatprep.subr.bf16.mxu0 %v1548
    %1597 = vmatpush1.bf16.msra.mxu0 %v1547
    %1598 = vmatprep.subr.bf16.mxu0 %v1546
    %1599 = vmatpush1.bf16.msra.mxu0 %v1545
    %1600 = vmatprep.subr.bf16.mxu0 %v1544
    %1601 = vmatpush1.bf16.msra.mxu0 %v1543
    %1602 = vmatprep.subr.bf16.mxu0 %v1542
    %1603 = vmatpush1.bf16.msra.mxu0 %v1541
    %1604 = vmatprep.subr.bf16.mxu0 0
    %1605 = vmatpush2.bf16.msra.mxu0 0
    %1606 = vmatprep.subr.bf16.mxu0 0
    %1607 = vmatpush2.bf16.msra.mxu0 0
    %1608 = vmatprep.subr.bf16.mxu0 0
    %1609 = vmatpush2.bf16.msra.mxu0 0
    %1610 = vmatprep.subr.bf16.mxu0 0
    %1611 = vmatpush2.bf16.msra.mxu0 0
    %1612 = vmatprep.subr.bf16.mxu0 0
    %1613 = vmatpush2.bf16.msra.mxu0 0
    %1614 = vmatprep.subr.bf16.mxu0 0
    %1615 = vmatpush2.bf16.msra.mxu0 0
    %1616 = vmatprep.subr.bf16.mxu0 %v1586
    %1617 = vmatpush2.bf16.msra.mxu0 %v1583
    %1618 = vmatprep.subr.bf16.mxu0 %v1558
    %1619 = vmatpush2.bf16.msra.mxu0 %v1557
    %1620 = vmatprep.mubr.bf16.mxu0 %v1580
    %1621 = vmatmul.mubr.bf16.gmra.mxu0 %v1454
    %v1622 = vpop.f32.mrf.mxu0
    %v1623 = vadd.f32 %v1479, %v1622
    %v1624 = vpop.f32.mrf.mxu0
    %v1625 = vadd.f32 %v1483, %v1624
    %v1626 = vpop.f32.mrf.mxu0
    %v1627 = vpop.f32.mrf.mxu0
    %1628 = vdwg.mxu0
    %1629 = vst [vmem:[%s6] sm:$0xff] %v1623
    %1630 = vst.msk [vmem:[%s6 + $0x8] sm:$0xff] %vm293, %v1625
    // Predicated region
    $region34: #{forward_steps.1} parent=1 // pred_check
      _
    $region35: #{forward_steps.1} parent=1 // pred_check_branch
      %1632 = sbr.rel (0) target = $region37
    $region36: #{forward_steps.1} parent=1 // pred_region
      _
    $region37: #{forward_steps.1} parent=1 // pred_fallthru
      _
    // Predicated region
    $region38: #{forward_steps.1} parent=1 // pred_check
      _
    $region39: #{forward_steps.1} parent=1 // pred_check_branch
      %1634 = sbr.rel (0) target = $region41
    $region40: #{forward_steps.1} parent=1 // pred_region
      _
    $region41: #{forward_steps.1} parent=1 // pred_fallthru
      _
    %1635 = vsyncpa [#allocation4], 1
    %1636 = vsyncpa [#allocation6], 1

</llo_original>
